<compile_context>
chip_gen: v7x
topology: tpu7x:2x2x1
jax: 0.10.0
libtpu: 0.0.40
codegen_flags: <defaults>
</compile_context>

<pallas_src>
import jax
import jax.numpy as jnp
from jax import lax
from jax.experimental import pallas as pl
from jax.experimental.pallas import tpu as pltpu


# ----------------------------- Pallas kernel ------------------------------ #
def _decoder_block_kernel(x_ref, w1_ref, w2_ref, s1_ref, b1_ref, s2_ref, b2_ref,
                          o_ref, h_ref):
    # x_ref : (1, H+2, W*C1)  H-padded input rows for one image
    # w1_ref: (3, W*C1, W*C2) block-banded conv1 weights (one matrix per ky tap)
    # w2_ref: (3, W*C2, W*C2) block-banded conv2 weights
    # s*/b* : (1, W*C2)       folded BN scale / bias, tiled over W
    # o_ref : (1, H, W*C2)    output rows
    # h_ref : (H+2, W*C2)     VMEM scratch: conv1 activation with zero H-pad rows
    H = o_ref.shape[1]

    # ---- conv1 as 3 row-shifted matmuls + fused BN + ReLU ----
    acc1 = jnp.dot(x_ref[0, 0:H, :], w1_ref[0],
                   preferred_element_type=jnp.float32)
    acc1 += jnp.dot(x_ref[0, 1:H + 1, :], w1_ref[1],
                    preferred_element_type=jnp.float32)
    acc1 += jnp.dot(x_ref[0, 2:H + 2, :], w1_ref[2],
                    preferred_element_type=jnp.float32)
    h1 = jnp.maximum(acc1 * s1_ref[...] + b1_ref[...], 0.0)

    # conv1 activation stays in VMEM (zero border rows = conv2's H padding)
    h_ref[...] = jnp.zeros_like(h_ref)
    h_ref[1:H + 1, :] = h1

    # ---- conv2 as 3 row-shifted matmuls + fused BN + ReLU ----
    acc2 = jnp.dot(h_ref[0:H, :], w2_ref[0],
                   preferred_element_type=jnp.float32)
    acc2 += jnp.dot(h_ref[1:H + 1, :], w2_ref[1],
                    preferred_element_type=jnp.float32)
    acc2 += jnp.dot(h_ref[2:H + 2, :], w2_ref[2],
                    preferred_element_type=jnp.float32)
    y = jnp.maximum(acc2 * s2_ref[...] + b2_ref[...], 0.0)
    o_ref[0] = y.astype(o_ref.dtype)


# ------------------------------ glue helpers ------------------------------ #
def fold_bn(gamma, beta, mean, var, eps=1e-5):
    scale = gamma / jnp.sqrt(var + eps)
    bias = beta - mean * scale
    return scale, bias


def _banded_conv3x3_weights(w_hwio, W):
    """HWIO (3,3,Cin,Cout) conv weights -> (3, W*Cin, W*Cout) block-banded
    matrices (one per ky tap) with the W-direction zero padding folded in."""
    kH, kW, Cin, Cout = w_hwio.shape
    # S[dx, xin, xout] = 1  iff  xin == xout + dx - 1  (band clipped at edges)
    S = jnp.stack([jnp.eye(W, k=1 - dx, dtype=w_hwio.dtype) for dx in range(kW)])
    Wb = jnp.einsum("kax,dkio->daixo", S, w_hwio)        # (kH, W, Cin, W, Cout)
    return Wb.reshape(kH, W * Cin, W * Cout)


def fused_double_conv_bn_relu(x_nhwc, w1, bn1, w2, bn2):
    """ReLU(BN(conv3x3( ReLU(BN(conv3x3(x, w1))), w2 ))) in one pallas_call."""
    N, H, W, C1 = x_nhwc.shape
    C2 = w1.shape[-1]
    assert w1.shape == (3, 3, C1, C2) and w2.shape == (3, 3, C2, C2)
    WC1, WC2 = W * C1, W * C2

    s1, b1 = fold_bn(*bn1)
    s2, b2 = fold_bn(*bn2)

    # Row layout (N, H+2, W*C1): pure reshape + 2 zero rows for conv1 H padding.
    x_rows = jnp.pad(x_nhwc.reshape(N, H, WC1), ((0, 0), (1, 1), (0, 0)))

    w1b = _banded_conv3x3_weights(w1, W)                  # (3, W*C1, W*C2)
    w2b = _banded_conv3x3_weights(w2, W)                  # (3, W*C2, W*C2)
    s1r = jnp.tile(s1.astype(jnp.float32), W).reshape(1, WC2)
    b1r = jnp.tile(b1.astype(jnp.float32), W).reshape(1, WC2)
    s2r = jnp.tile(s2.astype(jnp.float32), W).reshape(1, WC2)
    b2r = jnp.tile(b2.astype(jnp.float32), W).reshape(1, WC2)

    out_rows = pl.pallas_call(
        _decoder_block_kernel,
        out_shape=jax.ShapeDtypeStruct((N, H, WC2), x_nhwc.dtype),
        grid_spec=pltpu.PrefetchScalarGridSpec(
            num_scalar_prefetch=0,
            grid=(N,),
            in_specs=[
                pl.BlockSpec((1, H + 2, WC1), lambda b: (b, 0, 0)),  # image rows
                pl.BlockSpec((3, WC1, WC2), lambda b: (0, 0, 0)),    # conv1 W
                pl.BlockSpec((3, WC2, WC2), lambda b: (0, 0, 0)),    # conv2 W
                pl.BlockSpec((1, WC2), lambda b: (0, 0)),            # BN1 scale
                pl.BlockSpec((1, WC2), lambda b: (0, 0)),            # BN1 bias
                pl.BlockSpec((1, WC2), lambda b: (0, 0)),            # BN2 scale
                pl.BlockSpec((1, WC2), lambda b: (0, 0)),            # BN2 bias
            ],
            out_specs=pl.BlockSpec((1, H, WC2), lambda b: (b, 0, 0)),
            scratch_shapes=[pltpu.VMEM((H + 2, WC2), jnp.float32)],
        ),
        compiler_params=pltpu.CompilerParams(
            dimension_semantics=("parallel",),       # shards batch over v7x TCs
            vmem_limit_bytes=32 * 1024 * 1024,       # ~4 MB actually needed
        ),
    )(x_rows, w1b, w2b, s1r, b1r, s2r, b2r)
    return out_rows.reshape(N, H, W, C2)


def _interp_matrix_align_corners(n_in, n_out, dtype=jnp.float32):
    """Bilinear (align_corners=True) interpolation matrix of shape (n_out, n_in)."""
    if n_in == 1:
        return jnp.ones((n_out, 1), dtype)
    pos = jnp.arange(n_out, dtype=dtype) * (n_in - 1) / (n_out - 1)
    lo = jnp.clip(jnp.floor(pos).astype(jnp.int32), 0, n_in - 2)
    frac = pos - lo.astype(dtype)
    rows = jnp.arange(n_out)
    M = jnp.zeros((n_out, n_in), dtype)
    M = M.at[rows, lo].add(1.0 - frac)
    M = M.at[rows, lo + 1].add(frac)
    return M


def upsample_bilinear_2x_align_corners(x_nhwc):
    """Matches torch.nn.UpsamplingBilinear2d(scale_factor=2) (align_corners=True).
    Matmul-based (no gathers): y = Ah @ x @ Aw^T per (batch, channel)."""
    N, H, W, C = x_nhwc.shape
    Ah = _interp_matrix_align_corners(H, 2 * H, x_nhwc.dtype)
    Aw = _interp_matrix_align_corners(W, 2 * W, x_nhwc.dtype)
    y = jnp.einsum("oh,nhwc->nowc", Ah, x_nhwc, precision=lax.Precision.HIGHEST)
    y = jnp.einsum("pw,nowc->nopc", Aw, y, precision=lax.Precision.HIGHEST)
    return y


def decoder_block_forward(x_nchw, skip_nchw, params):
    """DecoderBlock.forward. Inputs/outputs are NCHW (PyTorch convention)."""
    x = jnp.transpose(x_nchw, (0, 2, 3, 1))                 # -> NHWC
    x = upsample_bilinear_2x_align_corners(x)
    if skip_nchw is not None:
        skip = jnp.transpose(skip_nchw, (0, 2, 3, 1))
        x = jnp.concatenate([x, skip], axis=-1)
    x = fused_double_conv_bn_relu(x, params["w1"], params["bn1"],
                                  params["w2"], params["bn2"])
    return jnp.transpose(x, (0, 3, 1, 2))                   # -> NCHW


# ------------------------------ reference --------------------------------- #
def _conv3x3_bn_relu_ref(x_nhwc, w_hwio, scale, bias):
    y = lax.conv_general_dilated(
        x_nhwc, w_hwio, window_strides=(1, 1), padding="SAME",
        dimension_numbers=("NHWC", "HWIO", "NHWC"),
        precision=lax.Precision.HIGHEST)
    y = y * scale[None, None, None, :] + bias[None, None, None, :]
    return jnp.maximum(y, 0.0)


def decoder_block_ref(x_nchw, skip_nchw, params):
    x = jnp.transpose(x_nchw, (0, 2, 3, 1))
    x = upsample_bilinear_2x_align_corners(x)
    if skip_nchw is not None:
        skip = jnp.transpose(skip_nchw, (0, 2, 3, 1))
        x = jnp.concatenate([x, skip], axis=-1)
    s1, b1 = fold_bn(*params["bn1"])
    x = _conv3x3_bn_relu_ref(x, params["w1"], s1, b1)
    s2, b2 = fold_bn(*params["bn2"])
    x = _conv3x3_bn_relu_ref(x, params["w2"], s2, b2)
    return jnp.transpose(x, (0, 3, 1, 2))


# --------------------------------- main ------------------------------------ #
if __name__ == "__main__":
    key = jax.random.PRNGKey(0)
    k_x, k_s, k_w1, k_w2, k_g1, k_b1, k_m1, k_v1, k_g2, k_b2, k_m2, k_v2 = (
        jax.random.split(key, 12))

    # DecoderBlock(in_channels=8, out_channels=8, skip_channels=4)
    in_ch, skip_ch, out_ch = 8, 4, 8
    N, H, W = 2, 16, 16                      # x is NCHW; skip matches 2x spatial

    x = jax.random.normal(k_x, (N, in_ch, H, W), jnp.float32)
    skip = jax.random.normal(k_s, (N, skip_ch, 2 * H, 2 * W), jnp.float32)

    c1_in = in_ch + skip_ch
    params = {
        # conv weights stored HWIO (ky, kx, cin, cout)
        "w1": 0.1 * jax.random.normal(k_w1, (3, 3, c1_in, out_ch), jnp.float32),
        "w2": 0.1 * jax.random.normal(k_w2, (3, 3, out_ch, out_ch), jnp.float32),
        # BN params: (gamma, beta, running_mean, running_var)
        "bn1": (1.0 + 0.1 * jax.random.normal(k_g1, (out_ch,), jnp.float32),
                0.1 * jax.random.normal(k_b1, (out_ch,), jnp.float32),
                0.05 * jax.random.normal(k_m1, (out_ch,), jnp.float32),
                1.0 + 0.1 * jax.nn.softplus(jax.random.normal(k_v1, (out_ch,)))),
        "bn2": (1.0 + 0.1 * jax.random.normal(k_g2, (out_ch,), jnp.float32),
                0.1 * jax.random.normal(k_b2, (out_ch,), jnp.float32),
                0.05 * jax.random.normal(k_m2, (out_ch,), jnp.float32),
                1.0 + 0.1 * jax.nn.softplus(jax.random.normal(k_v2, (out_ch,)))),
    }

    out = decoder_block_forward(x, skip, params)
    out = jax.block_until_ready(out)
    assert out.shape == (N, out_ch, 2 * H, 2 * W), out.shape

    ref = jax.block_until_ready(decoder_block_ref(x, skip, params))
    assert jnp.allclose(out, ref, atol=2e-3, rtol=2e-3), (
        float(jnp.max(jnp.abs(out - ref))))

    print("KERNEL_OK")
</pallas_src>

<mosaic_0001>
module attributes {stable_mosaic.version = 11 : i64} {
  func.func @_decoder_block_kernel(%arg0: i32, %arg1: memref<1x34x384xf32, #tpu.memory_space<vmem>>, %arg2: memref<3x384x256xf32, #tpu.memory_space<vmem>>, %arg3: memref<3x256x256xf32, #tpu.memory_space<vmem>>, %arg4: memref<1x256xf32, #tpu.memory_space<vmem>>, %arg5: memref<1x256xf32, #tpu.memory_space<vmem>>, %arg6: memref<1x256xf32, #tpu.memory_space<vmem>>, %arg7: memref<1x256xf32, #tpu.memory_space<vmem>>, %arg8: memref<1x32x256xf32, #tpu.memory_space<vmem>>, %arg9: memref<34x256xf32, #tpu.memory_space<vmem>>) attributes {dimension_semantics = [#tpu.dimension_semantics<parallel>], iteration_bounds = array<i64: 2>, scalar_prefetch = 0 : i64, scratch_operands = 1 : i64, tpu.core_type = #tpu.core_type<tc>, window_params = [{transform_indices = @transform_0, window_bounds = array<i64: 1, 34, 384>}, {pipeline_mode = #tpu.pipeline_mode<synchronous>, transform_indices = @transform_1, window_bounds = array<i64: 3, 384, 256>}, {pipeline_mode = #tpu.pipeline_mode<synchronous>, transform_indices = @transform_2, window_bounds = array<i64: 3, 256, 256>}, {pipeline_mode = #tpu.pipeline_mode<synchronous>, transform_indices = @transform_3, window_bounds = array<i64: 1, 256>}, {pipeline_mode = #tpu.pipeline_mode<synchronous>, transform_indices = @transform_4, window_bounds = array<i64: 1, 256>}, {pipeline_mode = #tpu.pipeline_mode<synchronous>, transform_indices = @transform_5, window_bounds = array<i64: 1, 256>}, {pipeline_mode = #tpu.pipeline_mode<synchronous>, transform_indices = @transform_6, window_bounds = array<i64: 1, 256>}, {transform_indices = @transform_7, window_bounds = array<i64: 1, 32, 256>}]} {
    %c0 = arith.constant 0 : index
    %c0_0 = arith.constant 0 : index
    %c0_1 = arith.constant 0 : index
    %0 = vector.load %arg1[%c0, %c0_0, %c0_1] : memref<1x34x384xf32, #tpu.memory_space<vmem>>, vector<1x32x384xf32>
    %1 = vector.shape_cast %0 : vector<1x32x384xf32> to vector<32x384xf32>
    %c0_2 = arith.constant 0 : index
    %c0_3 = arith.constant 0 : index
    %c0_4 = arith.constant 0 : index
    %2 = vector.load %arg2[%c0_2, %c0_3, %c0_4] : memref<3x384x256xf32, #tpu.memory_space<vmem>>, vector<1x384x256xf32>
    %3 = vector.shape_cast %2 : vector<1x384x256xf32> to vector<384x256xf32>
    %cst = arith.constant dense<0.000000e+00> : vector<32x256xf32>
    %4 = tpu.matmul %1, %3, %cst {dimension_numbers = #tpu.dot_dimension_numbers<[1], [0], [0], [1], [0, 0, 1, 1], [], []>} : vector<32x384xf32>, vector<384x256xf32>, vector<32x256xf32> -> vector<32x256xf32>
    %c0_5 = arith.constant 0 : index
    %c1 = arith.constant 1 : index
    %c0_6 = arith.constant 0 : index
    %5 = vector.load %arg1[%c0_5, %c1, %c0_6] : memref<1x34x384xf32, #tpu.memory_space<vmem>>, vector<1x32x384xf32>
    %6 = vector.shape_cast %5 : vector<1x32x384xf32> to vector<32x384xf32>
    %c1_7 = arith.constant 1 : index
    %c0_8 = arith.constant 0 : index
    %c0_9 = arith.constant 0 : index
    %7 = vector.load %arg2[%c1_7, %c0_8, %c0_9] : memref<3x384x256xf32, #tpu.memory_space<vmem>>, vector<1x384x256xf32>
    %8 = vector.shape_cast %7 : vector<1x384x256xf32> to vector<384x256xf32>
    %cst_10 = arith.constant dense<0.000000e+00> : vector<32x256xf32>
    %9 = tpu.matmul %6, %8, %cst_10 {dimension_numbers = #tpu.dot_dimension_numbers<[1], [0], [0], [1], [0, 0, 1, 1], [], []>} : vector<32x384xf32>, vector<384x256xf32>, vector<32x256xf32> -> vector<32x256xf32>
    %10 = arith.addf %4, %9 : vector<32x256xf32>
    %c0_11 = arith.constant 0 : index
    %c2 = arith.constant 2 : index
    %c0_12 = arith.constant 0 : index
    %11 = vector.load %arg1[%c0_11, %c2, %c0_12] : memref<1x34x384xf32, #tpu.memory_space<vmem>>, vector<1x32x384xf32>
    %12 = vector.shape_cast %11 : vector<1x32x384xf32> to vector<32x384xf32>
    %c2_13 = arith.constant 2 : index
    %c0_14 = arith.constant 0 : index
    %c0_15 = arith.constant 0 : index
    %13 = vector.load %arg2[%c2_13, %c0_14, %c0_15] : memref<3x384x256xf32, #tpu.memory_space<vmem>>, vector<1x384x256xf32>
    %14 = vector.shape_cast %13 : vector<1x384x256xf32> to vector<384x256xf32>
    %cst_16 = arith.constant dense<0.000000e+00> : vector<32x256xf32>
    %15 = tpu.matmul %12, %14, %cst_16 {dimension_numbers = #tpu.dot_dimension_numbers<[1], [0], [0], [1], [0, 0, 1, 1], [], []>} : vector<32x384xf32>, vector<384x256xf32>, vector<32x256xf32> -> vector<32x256xf32>
    %16 = arith.addf %10, %15 : vector<32x256xf32>
    %c0_17 = arith.constant 0 : index
    %c0_18 = arith.constant 0 : index
    %17 = vector.load %arg4[%c0_17, %c0_18] : memref<1x256xf32, #tpu.memory_space<vmem>>, vector<1x256xf32>
    %18 = vector.broadcast %17 : vector<1x256xf32> to vector<32x256xf32>
    %19 = arith.mulf %16, %18 : vector<32x256xf32>
    %c0_19 = arith.constant 0 : index
    %c0_20 = arith.constant 0 : index
    %20 = vector.load %arg5[%c0_19, %c0_20] : memref<1x256xf32, #tpu.memory_space<vmem>>, vector<1x256xf32>
    %21 = vector.broadcast %20 : vector<1x256xf32> to vector<32x256xf32>
    %22 = arith.addf %19, %21 : vector<32x256xf32>
    %cst_21 = arith.constant 0.000000e+00 : f32
    %23 = vector.broadcast %cst_21 : f32 to vector<32x256xf32>
    %24 = arith.maximumf %22, %23 : vector<32x256xf32>
    %cst_22 = arith.constant 0.000000e+00 : f32
    %25 = vector.broadcast %cst_22 : f32 to vector<34x256xf32>
    %c0_23 = arith.constant 0 : index
    %c0_24 = arith.constant 0 : index
    %26 = vector.load %arg9[%c0_23, %c0_24] : memref<34x256xf32, #tpu.memory_space<vmem>>, vector<34x256xf32>
    tpu.vector_store %arg9[%c0_23, %c0_24], %25 {strides = array<i32>} : memref<34x256xf32, #tpu.memory_space<vmem>>, vector<34x256xf32>,
    %c1_25 = arith.constant 1 : index
    %c0_26 = arith.constant 0 : index
    %27 = vector.load %arg9[%c1_25, %c0_26] : memref<34x256xf32, #tpu.memory_space<vmem>>, vector<32x256xf32>
    tpu.vector_store %arg9[%c1_25, %c0_26], %24 {strides = array<i32>} : memref<34x256xf32, #tpu.memory_space<vmem>>, vector<32x256xf32>,
    %c0_27 = arith.constant 0 : index
    %c0_28 = arith.constant 0 : index
    %28 = vector.load %arg9[%c0_27, %c0_28] : memref<34x256xf32, #tpu.memory_space<vmem>>, vector<32x256xf32>
    %c0_29 = arith.constant 0 : index
    %c0_30 = arith.constant 0 : index
    %c0_31 = arith.constant 0 : index
    %29 = vector.load %arg3[%c0_29, %c0_30, %c0_31] : memref<3x256x256xf32, #tpu.memory_space<vmem>>, vector<1x256x256xf32>
    %30 = vector.shape_cast %29 : vector<1x256x256xf32> to vector<256x256xf32>
    %cst_32 = arith.constant dense<0.000000e+00> : vector<32x256xf32>
    %31 = tpu.matmul %28, %30, %cst_32 {dimension_numbers = #tpu.dot_dimension_numbers<[1], [0], [0], [1], [0, 0, 1, 1], [], []>} : vector<32x256xf32>, vector<256x256xf32>, vector<32x256xf32> -> vector<32x256xf32>
    %c1_33 = arith.constant 1 : index
    %c0_34 = arith.constant 0 : index
    %32 = vector.load %arg9[%c1_33, %c0_34] : memref<34x256xf32, #tpu.memory_space<vmem>>, vector<32x256xf32>
    %c1_35 = arith.constant 1 : index
    %c0_36 = arith.constant 0 : index
    %c0_37 = arith.constant 0 : index
    %33 = vector.load %arg3[%c1_35, %c0_36, %c0_37] : memref<3x256x256xf32, #tpu.memory_space<vmem>>, vector<1x256x256xf32>
    %34 = vector.shape_cast %33 : vector<1x256x256xf32> to vector<256x256xf32>
    %cst_38 = arith.constant dense<0.000000e+00> : vector<32x256xf32>
    %35 = tpu.matmul %32, %34, %cst_38 {dimension_numbers = #tpu.dot_dimension_numbers<[1], [0], [0], [1], [0, 0, 1, 1], [], []>} : vector<32x256xf32>, vector<256x256xf32>, vector<32x256xf32> -> vector<32x256xf32>
    %36 = arith.addf %31, %35 : vector<32x256xf32>
    %c2_39 = arith.constant 2 : index
    %c0_40 = arith.constant 0 : index
    %37 = vector.load %arg9[%c2_39, %c0_40] : memref<34x256xf32, #tpu.memory_space<vmem>>, vector<32x256xf32>
    %c2_41 = arith.constant 2 : index
    %c0_42 = arith.constant 0 : index
    %c0_43 = arith.constant 0 : index
    %38 = vector.load %arg3[%c2_41, %c0_42, %c0_43] : memref<3x256x256xf32, #tpu.memory_space<vmem>>, vector<1x256x256xf32>
    %39 = vector.shape_cast %38 : vector<1x256x256xf32> to vector<256x256xf32>
    %cst_44 = arith.constant dense<0.000000e+00> : vector<32x256xf32>
    %40 = tpu.matmul %37, %39, %cst_44 {dimension_numbers = #tpu.dot_dimension_numbers<[1], [0], [0], [1], [0, 0, 1, 1], [], []>} : vector<32x256xf32>, vector<256x256xf32>, vector<32x256xf32> -> vector<32x256xf32>
    %41 = arith.addf %36, %40 : vector<32x256xf32>
    %c0_45 = arith.constant 0 : index
    %c0_46 = arith.constant 0 : index
    %42 = vector.load %arg6[%c0_45, %c0_46] : memref<1x256xf32, #tpu.memory_space<vmem>>, vector<1x256xf32>
    %43 = vector.broadcast %42 : vector<1x256xf32> to vector<32x256xf32>
    %44 = arith.mulf %41, %43 : vector<32x256xf32>
    %c0_47 = arith.constant 0 : index
    %c0_48 = arith.constant 0 : index
    %45 = vector.load %arg7[%c0_47, %c0_48] : memref<1x256xf32, #tpu.memory_space<vmem>>, vector<1x256xf32>
    %46 = vector.broadcast %45 : vector<1x256xf32> to vector<32x256xf32>
    %47 = arith.addf %44, %46 : vector<32x256xf32>
    %cst_49 = arith.constant 0.000000e+00 : f32
    %48 = vector.broadcast %cst_49 : f32 to vector<32x256xf32>
    %49 = arith.maximumf %47, %48 : vector<32x256xf32>
    %c0_50 = arith.constant 0 : index
    %c0_51 = arith.constant 0 : index
    %c0_52 = arith.constant 0 : index
    %50 = vector.load %arg8[%c0_50, %c0_51, %c0_52] : memref<1x32x256xf32, #tpu.memory_space<vmem>>, vector<1x32x256xf32>
    %51 = vector.shape_cast %50 : vector<1x32x256xf32> to vector<32x256xf32>
    %52 = vector.shape_cast %49 : vector<32x256xf32> to vector<1x32x256xf32>
    tpu.vector_store %arg8[%c0_50, %c0_51, %c0_52], %52 {strides = array<i32>} : memref<1x32x256xf32, #tpu.memory_space<vmem>>, vector<1x32x256xf32>,
    return
  }
  func.func @transform_0(%arg0: i32) -> (i32, i32, i32) {
    %c0_i32 = arith.constant 0 : i32
    %c0_i32_0 = arith.constant 0 : i32
    %c0_i32_1 = arith.constant 0 : i32
    return %arg0, %c0_i32, %c0_i32_0 : i32, i32, i32
  }
  func.func @transform_1(%arg0: i32) -> (i32, i32, i32) {
    %c0_i32 = arith.constant 0 : i32
    %c0_i32_0 = arith.constant 0 : i32
    %c0_i32_1 = arith.constant 0 : i32
    %c0_i32_2 = arith.constant 0 : i32
    return %c0_i32, %c0_i32_0, %c0_i32_1 : i32, i32, i32
  }
  func.func @transform_2(%arg0: i32) -> (i32, i32, i32) {
    %c0_i32 = arith.constant 0 : i32
    %c0_i32_0 = arith.constant 0 : i32
    %c0_i32_1 = arith.constant 0 : i32
    %c0_i32_2 = arith.constant 0 : i32
    return %c0_i32, %c0_i32_0, %c0_i32_1 : i32, i32, i32
  }
  func.func @transform_3(%arg0: i32) -> (i32, i32) {
    %c0_i32 = arith.constant 0 : i32
    %c0_i32_0 = arith.constant 0 : i32
    %c0_i32_1 = arith.constant 0 : i32
    return %c0_i32, %c0_i32_0 : i32, i32
  }
  func.func @transform_4(%arg0: i32) -> (i32, i32) {
    %c0_i32 = arith.constant 0 : i32
    %c0_i32_0 = arith.constant 0 : i32
    %c0_i32_1 = arith.constant 0 : i32
    return %c0_i32, %c0_i32_0 : i32, i32
  }
  func.func @transform_5(%arg0: i32) -> (i32, i32) {
    %c0_i32 = arith.constant 0 : i32
    %c0_i32_0 = arith.constant 0 : i32
    %c0_i32_1 = arith.constant 0 : i32
    return %c0_i32, %c0_i32_0 : i32, i32
  }
  func.func @transform_6(%arg0: i32) -> (i32, i32) {
    %c0_i32 = arith.constant 0 : i32
    %c0_i32_0 = arith.constant 0 : i32
    %c0_i32_1 = arith.constant 0 : i32
    return %c0_i32, %c0_i32_0 : i32, i32
  }
  func.func @transform_7(%arg0: i32) -> (i32, i32, i32) {
    %c0_i32 = arith.constant 0 : i32
    %c0_i32_0 = arith.constant 0 : i32
    %c0_i32_1 = arith.constant 0 : i32
    return %arg0, %c0_i32, %c0_i32_0 : i32, i32, i32
  }
}

</mosaic_0001>

<llo_original>
// kernel: tpu_custom_call.1
$region0: #{tpu_custom_call.1}
  #allocation0 [shape = 'u32[]', space=smem, size = 0x4, offset = 0x4, fixed_abs, tag = 'smem constant byte address 0x4 - core index']
  #allocation1 [shape = 'u32[144,128]{1,0:T(1,128)}', space=vmem, size = 0x12000, scoped, tag = 'internal scratch']
  #allocation2 [shape = 'f32[34,256]{1,0:T(8,128)}', space=vmem, size = 0xa000, scoped, tag = 'scratch operand']
  %s0 = inlined_call_operand.vmem [shape: f32[2,34,384], index: 0, kind: input, shape index: {}]
  %s1 = inlined_call_operand.hbm [shape: f32[3,384,256], index: 1, kind: input, shape index: {}]
  %s2 = inlined_call_operand.hbm [shape: f32[3,256,256], index: 2, kind: input, shape index: {}]
  %s3 = inlined_call_operand.hbm [shape: f32[1,256], index: 3, kind: input, shape index: {}]
  %s4 = inlined_call_operand.hbm [shape: f32[1,256], index: 4, kind: input, shape index: {}]
  %s5 = inlined_call_operand.hbm [shape: f32[1,256], index: 5, kind: input, shape index: {}]
  %s6 = inlined_call_operand.hbm [shape: f32[1,256], index: 6, kind: input, shape index: {}]
  %s7 = inlined_call_operand.hbm [shape: f32[2,32,256], index: 7, kind: output, shape index: {}]
  %s8 = sld [smem:[#allocation0]]
  $region85: #{tpu_custom_call.1} parent=0
    _
  %s10 = ssub.s32 1, %s8
  %s11 = scalar_select 0, %s10, %s8
  $region1: #{tpu_custom_call.1} parent=0
    #allocation3 [shape = 'u8[1179648]{0}', space=vmem, size = 0x120000, scoped, tag = 'input window, operand 1, single buffered']
    #allocation4 [shape = 's32[2]{0}', space=sflag, size = 0x8, scoped, tag = 'scoped memory for tpu_custom_call.1']
    #allocation5 [shape = 's32[2]{0}', space=sflag, size = 0x8, scoped, tag = 'scoped memory for tpu_custom_call.1']
    #allocation6 [shape = 'u8[786432]{0}', space=vmem, size = 0xc0000, scoped, tag = 'input window, operand 2, single buffered']
    #allocation7 [shape = 's32[1]{0}', space=sflag, size = 0x4, scoped, tag = 'scoped memory for tpu_custom_call.1']
    #allocation8 [shape = 'u8[1024]{0}', space=vmem, size = 0x400, scoped, tag = 'input window, operand 3, single buffered']
    #allocation9 [shape = 'u8[1024]{0}', space=vmem, size = 0x400, scoped, tag = 'input window, operand 4, single buffered']
    #allocation10 [shape = 's32[1]{0}', space=sflag, size = 0x4, scoped, tag = 'scoped memory for tpu_custom_call.1']
    #allocation11 [shape = 'u8[1024]{0}', space=vmem, size = 0x400, scoped, tag = 'input window, operand 5, single buffered']
    #allocation12 [shape = 'u8[1024]{0}', space=vmem, size = 0x400, scoped, tag = 'input window, operand 6, single buffered']
    #allocation13 [shape = 's32[1]{0}', space=sflag, size = 0x4, scoped, tag = 'scoped memory for tpu_custom_call.1']
    #allocation14 [shape = 'u8[65536]{0}', space=vmem, size = 0x10000, scoped, tag = 'output window, operand 0']
    %12 = vsyncpa [#allocation4], 0
    %13 = vsyncpa [#allocation7], 0
    %14 = vsyncpa [#allocation10], 0
    %15 = vsyncpa [#allocation13], 0
    %16 = vsyncpa [#allocation5], 0
    %s17 = scalar_lea.sflag [#allocation5], 1
    %18 = vsyncpa %s17, 0
    loop: start=0, step=1, limit=4
    $region2: #{tpu_custom_call.1} parent=1 // loop_pre_header
      _
    $region3: #{tpu_custom_call.1} parent=1 // loop_header
      %s20 = sphi 0, %s24
      %p21 = scmp.ge.s32.totalorder %s20, 4
      %s30 = sphi 0, %s32
      %s33 = sphi 0, %s30
      %s34 = sphi 0, %s33
      %s50 = sphi 0, %s34
      %s54 = sphi 0, %s54
      %s56 = sphi 0, %s54
      %s57 = sphi 0, %s56
      %s71 = sphi 0, %s57
      %s75 = sphi 0, %s75
      %s77 = sphi 0, %s75
      %s78 = sphi 0, %s77
      %s92 = sphi 0, %s78
      %s96 = sphi 0, %s96
      %s98 = sphi 0, %s96
      %s99 = sphi 0, %s98
      %s113 = sphi 0, %s99
      %s117 = sphi 0, %s117
      %s119 = sphi 0, %s117
      %s120 = sphi 0, %s119
      %s134 = sphi 0, %s120
      %s138 = sphi 0, %s138
      %s140 = sphi 0, %s138
      %s141 = sphi 0, %s140
      %s155 = sphi 0, %s141
      %s159 = sphi 0, %s159
      %s161 = sphi 0, %s159
      %s162 = sphi 0, %s161
      %s176 = sphi 0, %s162
      %s182 = sphi 0, %s184
      %s185 = sphi 0, %s182
      %s186 = sphi 0, %s185
      %s202 = sphi 0, %s186
    $region4: #{tpu_custom_call.1} parent=1 // loop_header_branch
      %23 = sbr.rel (%p21) target = $region8
    $region5: #{tpu_custom_call.1} parent=1 // loop_body
      %s25 = ssub.s32 %s20, 1
      %s26 = ssub.s32 %s20, 2
      %s27 = sadd.s32 %s20, 1
      %s28 = ssub.s32 %s20, %s27
      %p29 = scmp.eq.s32.totalorder %s28, 0
      %s31 = sadd.s32 %s30, 1
      %s32 = scalar_select %p29, %s30, %s31
      %p35 = pneg %p29
      %p36 = scmp.eq.s32.totalorder %s20, 1
      %p37 = por %p35, %p36
      %p38 = scmp.ne.s32.totalorder %s30, %s33
      %p39 = scmp.eq.s32.totalorder %s20, 0
      %p40 = por %p38, %p39
      %p41 = scmp.ne.s32.totalorder %s30, %s33
      %p42 = scmp.eq.s32.totalorder %s25, 1
      %p43 = por %p41, %p42
      %p44 = scmp.ne.s32.totalorder %s33, %s34
      %p45 = scmp.eq.s32.totalorder %s25, 0
      %p46 = por %p44, %p45
      %p47 = scmp.ne.s32.totalorder %s33, %s34
      %p48 = scmp.eq.s32.totalorder %s26, 1
      %p49 = por %p47, %p48
      %p51 = scmp.ne.s32.totalorder %s34, %s50
      %p52 = scmp.eq.s32.totalorder %s26, 0
      %p53 = por %p51, %p52
      %s55 = sadd.s32 %s54, 1
      %p58 = scmp.eq.s32.totalorder %s20, 1
      %p59 = scmp.ne.s32.totalorder %s54, %s56
      %p60 = scmp.eq.s32.totalorder %s20, 0
      %p61 = por %p59, %p60
      %p62 = scmp.ne.s32.totalorder %s54, %s56
      %p63 = scmp.eq.s32.totalorder %s25, 1
      %p64 = por %p62, %p63
      %p65 = scmp.ne.s32.totalorder %s56, %s57
      %p66 = scmp.eq.s32.totalorder %s25, 0
      %p67 = por %p65, %p66
      %p68 = scmp.ne.s32.totalorder %s56, %s57
      %p69 = scmp.eq.s32.totalorder %s26, 1
      %p70 = por %p68, %p69
      %p72 = scmp.ne.s32.totalorder %s57, %s71
      %p73 = scmp.eq.s32.totalorder %s26, 0
      %p74 = por %p72, %p73
      %s76 = sadd.s32 %s75, 1
      %p79 = scmp.eq.s32.totalorder %s20, 1
      %p80 = scmp.ne.s32.totalorder %s75, %s77
      %p81 = scmp.eq.s32.totalorder %s20, 0
      %p82 = por %p80, %p81
      %p83 = scmp.ne.s32.totalorder %s75, %s77
      %p84 = scmp.eq.s32.totalorder %s25, 1
      %p85 = por %p83, %p84
      %p86 = scmp.ne.s32.totalorder %s77, %s78
      %p87 = scmp.eq.s32.totalorder %s25, 0
      %p88 = por %p86, %p87
      %p89 = scmp.ne.s32.totalorder %s77, %s78
      %p90 = scmp.eq.s32.totalorder %s26, 1
      %p91 = por %p89, %p90
      %p93 = scmp.ne.s32.totalorder %s78, %s92
      %p94 = scmp.eq.s32.totalorder %s26, 0
      %p95 = por %p93, %p94
      %s97 = sadd.s32 %s96, 1
      %p100 = scmp.eq.s32.totalorder %s20, 1
      %p101 = scmp.ne.s32.totalorder %s96, %s98
      %p102 = scmp.eq.s32.totalorder %s20, 0
      %p103 = por %p101, %p102
      %p104 = scmp.ne.s32.totalorder %s96, %s98
      %p105 = scmp.eq.s32.totalorder %s25, 1
      %p106 = por %p104, %p105
      %p107 = scmp.ne.s32.totalorder %s98, %s99
      %p108 = scmp.eq.s32.totalorder %s25, 0
      %p109 = por %p107, %p108
      %p110 = scmp.ne.s32.totalorder %s98, %s99
      %p111 = scmp.eq.s32.totalorder %s26, 1
      %p112 = por %p110, %p111
      %p114 = scmp.ne.s32.totalorder %s99, %s113
      %p115 = scmp.eq.s32.totalorder %s26, 0
      %p116 = por %p114, %p115
      %s118 = sadd.s32 %s117, 1
      %p121 = scmp.eq.s32.totalorder %s20, 1
      %p122 = scmp.ne.s32.totalorder %s117, %s119
      %p123 = scmp.eq.s32.totalorder %s20, 0
      %p124 = por %p122, %p123
      %p125 = scmp.ne.s32.totalorder %s117, %s119
      %p126 = scmp.eq.s32.totalorder %s25, 1
      %p127 = por %p125, %p126
      %p128 = scmp.ne.s32.totalorder %s119, %s120
      %p129 = scmp.eq.s32.totalorder %s25, 0
      %p130 = por %p128, %p129
      %p131 = scmp.ne.s32.totalorder %s119, %s120
      %p132 = scmp.eq.s32.totalorder %s26, 1
      %p133 = por %p131, %p132
      %p135 = scmp.ne.s32.totalorder %s120, %s134
      %p136 = scmp.eq.s32.totalorder %s26, 0
      %p137 = por %p135, %p136
      %s139 = sadd.s32 %s138, 1
      %p142 = scmp.eq.s32.totalorder %s20, 1
      %p143 = scmp.ne.s32.totalorder %s138, %s140
      %p144 = scmp.eq.s32.totalorder %s20, 0
      %p145 = por %p143, %p144
      %p146 = scmp.ne.s32.totalorder %s138, %s140
      %p147 = scmp.eq.s32.totalorder %s25, 1
      %p148 = por %p146, %p147
      %p149 = scmp.ne.s32.totalorder %s140, %s141
      %p150 = scmp.eq.s32.totalorder %s25, 0
      %p151 = por %p149, %p150
      %p152 = scmp.ne.s32.totalorder %s140, %s141
      %p153 = scmp.eq.s32.totalorder %s26, 1
      %p154 = por %p152, %p153
      %p156 = scmp.ne.s32.totalorder %s141, %s155
      %p157 = scmp.eq.s32.totalorder %s26, 0
      %p158 = por %p156, %p157
      %s160 = sadd.s32 %s159, 1
      %p163 = scmp.eq.s32.totalorder %s20, 1
      %p164 = scmp.ne.s32.totalorder %s159, %s161
      %p165 = scmp.eq.s32.totalorder %s20, 0
      %p166 = por %p164, %p165
      %p167 = scmp.ne.s32.totalorder %s159, %s161
      %p168 = scmp.eq.s32.totalorder %s25, 1
      %p169 = por %p167, %p168
      %p170 = scmp.ne.s32.totalorder %s161, %s162
      %p171 = scmp.eq.s32.totalorder %s25, 0
      %p172 = por %p170, %p171
      %p173 = scmp.ne.s32.totalorder %s161, %s162
      %p174 = scmp.eq.s32.totalorder %s26, 1
      %p175 = por %p173, %p174
      %p177 = scmp.ne.s32.totalorder %s162, %s176
      %p178 = scmp.eq.s32.totalorder %s26, 0
      %p179 = por %p177, %p178
      %s180 = ssub.s32 %s20, %s27
      %p181 = scmp.eq.s32.totalorder %s180, 0
      %s183 = sadd.s32 %s182, 1
      %s184 = scalar_select %p181, %s182, %s183
      %p187 = pneg %p181
      %p188 = scmp.eq.s32.totalorder %s20, 1
      %p189 = por %p187, %p188
      %p190 = scmp.ne.s32.totalorder %s182, %s185
      %p191 = scmp.eq.s32.totalorder %s20, 0
      %p192 = por %p190, %p191
      %p193 = scmp.ne.s32.totalorder %s182, %s185
      %p194 = scmp.eq.s32.totalorder %s25, 1
      %p195 = por %p193, %p194
      %p196 = scmp.ne.s32.totalorder %s185, %s186
      %p197 = scmp.eq.s32.totalorder %s25, 0
      %p198 = por %p196, %p197
      %p199 = scmp.ne.s32.totalorder %s185, %s186
      %p200 = scmp.eq.s32.totalorder %s26, 1
      %p201 = por %p199, %p200
      %p203 = scmp.ne.s32.totalorder %s186, %s202
      %p204 = scmp.eq.s32.totalorder %s26, 0
      %p205 = por %p203, %p204
      %p206 = scmp.le.s32.totalorder 1, %s20
      %p207 = scmp.lt.s32.totalorder %s20, 3
      %p208 = pnand %p206, %p207
      %p209 = pneg %p208
      // Predicated region
      $region9: #{tpu_custom_call.1} parent=5 // pred_check
        _
      $region10: #{tpu_custom_call.1} parent=5 // pred_check_branch
        %211 = sbr.rel (%p208) target = $region12
      $region11: #{tpu_custom_call.1} parent=5 // pred_region
        %s212 = ssub.s32 %s20, 1
        // Predicated region
        $region13: #{tpu_custom_call.1} parent=11 // pred_check
          %p213 = pneg %p67
        $region14: #{tpu_custom_call.1} parent=11 // pred_check_branch
          %215 = sbr.rel (%p213) target = $region16
        $region15: #{tpu_custom_call.1} parent=11 // pred_region
          %s217 = ssub.s32 36864, 36864
          %218 = vsyncadd [#allocation4], %s217
          %s219 = sshll.u32 [#allocation3], 4
          %s220 = int_to_ptr.vmem [resolvable:$true] %s219
          %225 = dma.hbm_to_vmem [thread:$0]  %s1, 36864, %s220, [#allocation4], 256, 256, 16
        $region16: #{tpu_custom_call.1} parent=11 // pred_fallthru
          _
        // Predicated region
        $region17: #{tpu_custom_call.1} parent=11 // pred_check
          %p226 = pneg %p88
        $region18: #{tpu_custom_call.1} parent=11 // pred_check_branch
          %228 = sbr.rel (%p226) target = $region20
        $region19: #{tpu_custom_call.1} parent=11 // pred_region
          %s230 = ssub.s32 24576, 24576
          %231 = vsyncadd [#allocation7], %s230
          %s232 = sshll.u32 [#allocation6], 4
          %s233 = int_to_ptr.vmem [resolvable:$true] %s232
          %238 = dma.hbm_to_vmem [thread:$0]  %s2, 24576, %s233, [#allocation7], 256, 256, 16
        $region20: #{tpu_custom_call.1} parent=11 // pred_fallthru
          _
        // Predicated region
        $region21: #{tpu_custom_call.1} parent=11 // pred_check
          %p239 = pneg %p109
        $region22: #{tpu_custom_call.1} parent=11 // pred_check_branch
          %241 = sbr.rel (%p239) target = $region24
        $region23: #{tpu_custom_call.1} parent=11 // pred_region
          %s243 = ssub.s32 32, 32
          %244 = vsyncadd [#allocation7], %s243
          %s246 = sshll.u32 [#allocation8], 4
          %s247 = int_to_ptr.vmem [resolvable:$true] %s246
          %249 = dma.hbm_to_vmem [thread:$0]  %s3, 32, %s247, [#allocation7]
        $region24: #{tpu_custom_call.1} parent=11 // pred_fallthru
          _
        // Predicated region
        $region25: #{tpu_custom_call.1} parent=11 // pred_check
          %p250 = pneg %p130
        $region26: #{tpu_custom_call.1} parent=11 // pred_check_branch
          %252 = sbr.rel (%p250) target = $region28
        $region27: #{tpu_custom_call.1} parent=11 // pred_region
          %s254 = ssub.s32 32, 32
          %255 = vsyncadd [#allocation10], %s254
          %s257 = sshll.u32 [#allocation9], 4
          %s258 = int_to_ptr.vmem [resolvable:$true] %s257
          %260 = dma.hbm_to_vmem [thread:$0]  %s4, 32, %s258, [#allocation10]
        $region28: #{tpu_custom_call.1} parent=11 // pred_fallthru
          _
        // Predicated region
        $region29: #{tpu_custom_call.1} parent=11 // pred_check
          %p261 = pneg %p151
        $region30: #{tpu_custom_call.1} parent=11 // pred_check_branch
          %263 = sbr.rel (%p261) target = $region32
        $region31: #{tpu_custom_call.1} parent=11 // pred_region
          %s265 = ssub.s32 32, 32
          %266 = vsyncadd [#allocation10], %s265
          %s268 = sshll.u32 [#allocation11], 4
          %s269 = int_to_ptr.vmem [resolvable:$true] %s268
          %271 = dma.hbm_to_vmem [thread:$0]  %s5, 32, %s269, [#allocation10]
        $region32: #{tpu_custom_call.1} parent=11 // pred_fallthru
          _
        // Predicated region
        $region33: #{tpu_custom_call.1} parent=11 // pred_check
          %p272 = pneg %p172
        $region34: #{tpu_custom_call.1} parent=11 // pred_check_branch
          %274 = sbr.rel (%p272) target = $region36
        $region35: #{tpu_custom_call.1} parent=11 // pred_region
          %s276 = ssub.s32 32, 32
          %277 = vsyncadd [#allocation13], %s276
          %s279 = sshll.u32 [#allocation12], 4
          %s280 = int_to_ptr.vmem [resolvable:$true] %s279
          %282 = dma.hbm_to_vmem [thread:$0]  %s6, 32, %s280, [#allocation13]
        $region36: #{tpu_custom_call.1} parent=11 // pred_fallthru
          _
      $region12: #{tpu_custom_call.1} parent=5 // pred_fallthru
        _
      %p283 = scmp.lt.s32.totalorder %s20, 2
      // Predicated region
      $region37: #{tpu_custom_call.1} parent=5 // pred_check
        %p284 = pneg %p283
      $region38: #{tpu_custom_call.1} parent=5 // pred_check_branch
        %286 = sbr.rel (%p284) target = $region40
      $region39: #{tpu_custom_call.1} parent=5 // pred_region
        // Predicated region
        $region41: #{tpu_custom_call.1} parent=39 // pred_check
          %p287 = pneg %p40
        $region42: #{tpu_custom_call.1} parent=39 // pred_check_branch
          %289 = sbr.rel (%p287) target = $region44
        $region43: #{tpu_custom_call.1} parent=39 // pred_region
          %p290 = scmp.lt.s32.totalorder %s20, 1
          %s291 = scalar_select %p290, %s20, 1
          %s292 = smul.addr %s291, 15
          %s293 = smul.addr %s292, 8
          %s294 = scalar_lea.vmem %s0, %s293
        $region44: #{tpu_custom_call.1} parent=39 // pred_fallthru
          _
      $region40: #{tpu_custom_call.1} parent=5 // pred_fallthru
        _
      %p295 = scmp.le.s32.totalorder 1, %s20
      %p296 = scmp.lt.s32.totalorder %s20, 3
      %p297 = pnand %p295, %p296
      %p298 = pneg %p297
      // Predicated region
      $region45: #{tpu_custom_call.1} parent=5 // pred_check
        _
      $region46: #{tpu_custom_call.1} parent=5 // pred_check_branch
        %300 = sbr.rel (%p297) target = $region48
      $region47: #{tpu_custom_call.1} parent=5 // pred_region
        %s301 = ssub.s32 %s20, 1
        // Predicated region
        $region49: #{tpu_custom_call.1} parent=47 // pred_check
          %p302 = pneg %p67
        $region50: #{tpu_custom_call.1} parent=47 // pred_check_branch
          %304 = sbr.rel (%p302) target = $region52
        $region51: #{tpu_custom_call.1} parent=47 // pred_region
          %305 = dma.done [#allocation4], 36864
        $region52: #{tpu_custom_call.1} parent=47 // pred_fallthru
          _
        // Predicated region
        $region53: #{tpu_custom_call.1} parent=47 // pred_check
          %p306 = pneg %p88
        $region54: #{tpu_custom_call.1} parent=47 // pred_check_branch
          %308 = sbr.rel (%p306) target = $region56
        $region55: #{tpu_custom_call.1} parent=47 // pred_region
          %309 = dma.done [#allocation7], 24576
        $region56: #{tpu_custom_call.1} parent=47 // pred_fallthru
          _
        // Predicated region
        $region57: #{tpu_custom_call.1} parent=47 // pred_check
          %p310 = pneg %p109
        $region58: #{tpu_custom_call.1} parent=47 // pred_check_branch
          %312 = sbr.rel (%p310) target = $region60
        $region59: #{tpu_custom_call.1} parent=47 // pred_region
          %313 = dma.done [#allocation7], 32
        $region60: #{tpu_custom_call.1} parent=47 // pred_fallthru
          _
        // Predicated region
        $region61: #{tpu_custom_call.1} parent=47 // pred_check
          %p314 = pneg %p130
        $region62: #{tpu_custom_call.1} parent=47 // pred_check_branch
          %316 = sbr.rel (%p314) target = $region64
        $region63: #{tpu_custom_call.1} parent=47 // pred_region
          %317 = dma.done [#allocation10], 32
        $region64: #{tpu_custom_call.1} parent=47 // pred_fallthru
          _
        // Predicated region
        $region65: #{tpu_custom_call.1} parent=47 // pred_check
          %p318 = pneg %p151
        $region66: #{tpu_custom_call.1} parent=47 // pred_check_branch
          %320 = sbr.rel (%p318) target = $region68
        $region67: #{tpu_custom_call.1} parent=47 // pred_region
          %321 = dma.done [#allocation10], 32
        $region68: #{tpu_custom_call.1} parent=47 // pred_fallthru
          _
        // Predicated region
        $region69: #{tpu_custom_call.1} parent=47 // pred_check
          %p322 = pneg %p172
        $region70: #{tpu_custom_call.1} parent=47 // pred_check_branch
          %324 = sbr.rel (%p322) target = $region72
        $region71: #{tpu_custom_call.1} parent=47 // pred_region
          %325 = dma.done [#allocation13], 32
        $region72: #{tpu_custom_call.1} parent=47 // pred_fallthru
          _
        %p326 = scmp.lt.s32.totalorder %s25, 1
        %s327 = scalar_select %p326, %s25, 1
        %s328 = smul.addr %s327, 15
        %s329 = smul.addr %s328, 8
        %s330 = scalar_lea.vmem %s0, %s329
        %p331 = pneg %p46
        %p332 = pneg %p43
        %p333 = pneg %p67
        %p334 = pneg %p64
        %p335 = pneg %p88
        %p336 = pneg %p85
        %p337 = pneg %p109
        %p338 = pneg %p106
        %p339 = pneg %p130
        %p340 = pneg %p127
        %p341 = pneg %p151
        %p342 = pneg %p148
        %p343 = pneg %p172
        %p344 = pneg %p169
        %p345 = pneg %p198
        %p346 = pneg %p195
        %s347 = sand.u32 %s185, 1
        %s348 = scalar_lea.sflag [#allocation5], %s347
        %s349 = sand.u32 %s185, 1
        %s350 = smul.addr %s349, 64
        %s351 = scalar_lea.vmem [#allocation14], %s350
        %p352 = scmp.lt.s32.totalorder %s25, 1
        %s353 = scalar_select %p352, %s25, 1
        %s354 = smul.addr %s353, 15
        %s355 = smul.addr %s354, 8
        %s356 = scalar_lea.vmem %s0, %s355
        %v357 = vld [vmem:[%s356] sm:$0xff]
        %v358 = vld [vmem:[%s356 + $0x8] sm:$0xff]
        %v359 = vld [vmem:[%s356 + $0x10] sm:$0xff]
        %v360 = vld [vmem:[%s356 + $0x18] sm:$0xff]
        %v361 = vld [vmem:[%s356 + $0x20] sm:$0xff]
        %v362 = vld [vmem:[%s356 + $0x28] sm:$0xff]
        %v363 = vld [vmem:[%s356 + $0x30] sm:$0xff]
        %v364 = vld [vmem:[%s356 + $0x38] sm:$0xff]
        %v365 = vld [vmem:[%s356 + $0x40] sm:$0xff]
        %v366 = vld [vmem:[%s356 + $0x48] sm:$0xff]
        %v367 = vld [vmem:[%s356 + $0x50] sm:$0xff]
        %v368 = vld [vmem:[%s356 + $0x58] sm:$0xff]
        %v369 = vld [vmem:[#allocation3] sm:$0xff]
        %v370 = vld [vmem:[#allocation3 + $0x8] sm:$0xff]
        %v371 = vld [vmem:[#allocation3 + $0x10] sm:$0xff]
        %v372 = vld [vmem:[#allocation3 + $0x18] sm:$0xff]
        %v373 = vld [vmem:[#allocation3 + $0x20] sm:$0xff]
        %v374 = vld [vmem:[#allocation3 + $0x28] sm:$0xff]
        %v375 = vld [vmem:[#allocation3 + $0x30] sm:$0xff]
        %v376 = vld [vmem:[#allocation3 + $0x38] sm:$0xff]
        %v377 = vld [vmem:[#allocation3 + $0x40] sm:$0xff]
        %v378 = vld [vmem:[#allocation3 + $0x48] sm:$0xff]
        %v379 = vld [vmem:[#allocation3 + $0x50] sm:$0xff]
        %v380 = vld [vmem:[#allocation3 + $0x58] sm:$0xff]
        %v381 = vld [vmem:[#allocation3 + $0x60] sm:$0xff]
        %v382 = vld [vmem:[#allocation3 + $0x68] sm:$0xff]
        %v383 = vld [vmem:[#allocation3 + $0x70] sm:$0xff]
        %v384 = vld [vmem:[#allocation3 + $0x78] sm:$0xff]
        %v385 = vld [vmem:[#allocation3 + $0x80] sm:$0xff]
        %v386 = vld [vmem:[#allocation3 + $0x88] sm:$0xff]
        %v387 = vld [vmem:[#allocation3 + $0x90] sm:$0xff]
        %v388 = vld [vmem:[#allocation3 + $0x98] sm:$0xff]
        %v389 = vld [vmem:[#allocation3 + $0xa0] sm:$0xff]
        %v390 = vld [vmem:[#allocation3 + $0xa8] sm:$0xff]
        %v391 = vld [vmem:[#allocation3 + $0xb0] sm:$0xff]
        %v392 = vld [vmem:[#allocation3 + $0xb8] sm:$0xff]
        %v393 = vld [vmem:[#allocation3 + $0xc0] sm:$0xff]
        %v394 = vld [vmem:[#allocation3 + $0xc8] sm:$0xff]
        %v395 = vld [vmem:[#allocation3 + $0xd0] sm:$0xff]
        %v396 = vld [vmem:[#allocation3 + $0xd8] sm:$0xff]
        %v397 = vld [vmem:[#allocation3 + $0xe0] sm:$0xff]
        %v398 = vld [vmem:[#allocation3 + $0xe8] sm:$0xff]
        %v399 = vld [vmem:[#allocation3 + $0xf0] sm:$0xff]
        %v400 = vld [vmem:[#allocation3 + $0xf8] sm:$0xff]
        %v401 = vld [vmem:[#allocation3 + $0x100] sm:$0xff]
        %v402 = vld [vmem:[#allocation3 + $0x108] sm:$0xff]
        %v403 = vld [vmem:[#allocation3 + $0x110] sm:$0xff]
        %v404 = vld [vmem:[#allocation3 + $0x118] sm:$0xff]
        %v405 = vld [vmem:[#allocation3 + $0x120] sm:$0xff]
        %v406 = vld [vmem:[#allocation3 + $0x128] sm:$0xff]
        %v407 = vld [vmem:[#allocation3 + $0x130] sm:$0xff]
        %v408 = vld [vmem:[#allocation3 + $0x138] sm:$0xff]
        %v409 = vld [vmem:[#allocation3 + $0x140] sm:$0xff]
        %v410 = vld [vmem:[#allocation3 + $0x148] sm:$0xff]
        %v411 = vld [vmem:[#allocation3 + $0x150] sm:$0xff]
        %v412 = vld [vmem:[#allocation3 + $0x158] sm:$0xff]
        %v413 = vld [vmem:[#allocation3 + $0x160] sm:$0xff]
        %v414 = vld [vmem:[#allocation3 + $0x168] sm:$0xff]
        %v415 = vld [vmem:[#allocation3 + $0x170] sm:$0xff]
        %v416 = vld [vmem:[#allocation3 + $0x178] sm:$0xff]
        %v417 = vld [vmem:[#allocation3 + $0x180] sm:$0xff]
        %v418 = vld [vmem:[#allocation3 + $0x188] sm:$0xff]
        %v419 = vld [vmem:[#allocation3 + $0x190] sm:$0xff]
        %v420 = vld [vmem:[#allocation3 + $0x198] sm:$0xff]
        %v421 = vld [vmem:[#allocation3 + $0x1a0] sm:$0xff]
        %v422 = vld [vmem:[#allocation3 + $0x1a8] sm:$0xff]
        %v423 = vld [vmem:[#allocation3 + $0x1b0] sm:$0xff]
        %v424 = vld [vmem:[#allocation3 + $0x1b8] sm:$0xff]
        %v425 = vld [vmem:[#allocation3 + $0x1c0] sm:$0xff]
        %v426 = vld [vmem:[#allocation3 + $0x1c8] sm:$0xff]
        %v427 = vld [vmem:[#allocation3 + $0x1d0] sm:$0xff]
        %v428 = vld [vmem:[#allocation3 + $0x1d8] sm:$0xff]
        %v429 = vld [vmem:[#allocation3 + $0x1e0] sm:$0xff]
        %v430 = vld [vmem:[#allocation3 + $0x1e8] sm:$0xff]
        %v431 = vld [vmem:[#allocation3 + $0x1f0] sm:$0xff]
        %v432 = vld [vmem:[#allocation3 + $0x1f8] sm:$0xff]
        %v433 = vld [vmem:[#allocation3 + $0x200] sm:$0xff]
        %v434 = vld [vmem:[#allocation3 + $0x208] sm:$0xff]
        %v435 = vld [vmem:[#allocation3 + $0x210] sm:$0xff]
        %v436 = vld [vmem:[#allocation3 + $0x218] sm:$0xff]
        %v437 = vld [vmem:[#allocation3 + $0x220] sm:$0xff]
        %v438 = vld [vmem:[#allocation3 + $0x228] sm:$0xff]
        %v439 = vld [vmem:[#allocation3 + $0x230] sm:$0xff]
        %v440 = vld [vmem:[#allocation3 + $0x238] sm:$0xff]
        %v441 = vld [vmem:[#allocation3 + $0x240] sm:$0xff]
        %v442 = vld [vmem:[#allocation3 + $0x248] sm:$0xff]
        %v443 = vld [vmem:[#allocation3 + $0x250] sm:$0xff]
        %v444 = vld [vmem:[#allocation3 + $0x258] sm:$0xff]
        %v445 = vld [vmem:[#allocation3 + $0x260] sm:$0xff]
        %v446 = vld [vmem:[#allocation3 + $0x268] sm:$0xff]
        %v447 = vld [vmem:[#allocation3 + $0x270] sm:$0xff]
        %v448 = vld [vmem:[#allocation3 + $0x278] sm:$0xff]
        %v449 = vld [vmem:[#allocation3 + $0x280] sm:$0xff]
        %v450 = vld [vmem:[#allocation3 + $0x288] sm:$0xff]
        %v451 = vld [vmem:[#allocation3 + $0x290] sm:$0xff]
        %v452 = vld [vmem:[#allocation3 + $0x298] sm:$0xff]
        %v453 = vld [vmem:[#allocation3 + $0x2a0] sm:$0xff]
        %v454 = vld [vmem:[#allocation3 + $0x2a8] sm:$0xff]
        %v455 = vld [vmem:[#allocation3 + $0x2b0] sm:$0xff]
        %v456 = vld [vmem:[#allocation3 + $0x2b8] sm:$0xff]
        %v457 = vld [vmem:[#allocation3 + $0x2c0] sm:$0xff]
        %v458 = vld [vmem:[#allocation3 + $0x2c8] sm:$0xff]
        %v459 = vld [vmem:[#allocation3 + $0x2d0] sm:$0xff]
        %v460 = vld [vmem:[#allocation3 + $0x2d8] sm:$0xff]
        %v461 = vld [vmem:[#allocation3 + $0x2e0] sm:$0xff]
        %v462 = vld [vmem:[#allocation3 + $0x2e8] sm:$0xff]
        %v463 = vld [vmem:[#allocation3 + $0x2f0] sm:$0xff]
        %v464 = vld [vmem:[#allocation3 + $0x2f8] sm:$0xff]
        %v465 = vld [vmem:[%s356] sm:$0xfe]
        %v466 = vld [vmem:[%s356 + $0x8] sm:$0xfe]
        %v467 = vld [vmem:[%s356 + $0x10] sm:$0xfe]
        %v468 = vld [vmem:[%s356 + $0x60] sm:$0x1]
        %v469 = vld [vmem:[%s356 + $0x68] sm:$0x1]
        %v470 = vld [vmem:[%s356 + $0x70] sm:$0x1]
        %s471 = scalar_lea.vmem [#allocation3], 768
        %v472 = vld [vmem:[%s471] sm:$0xff]
        %v473 = vld [vmem:[%s471 + $0x8] sm:$0xff]
        %v474 = vld [vmem:[%s471 + $0x10] sm:$0xff]
        %v475 = vld [vmem:[%s471 + $0x18] sm:$0xff]
        %v476 = vld [vmem:[%s471 + $0x20] sm:$0xff]
        %v477 = vld [vmem:[%s471 + $0x28] sm:$0xff]
        %v478 = vld [vmem:[%s471 + $0x30] sm:$0xff]
        %v479 = vld [vmem:[%s471 + $0x38] sm:$0xff]
        %v480 = vld [vmem:[%s471 + $0x40] sm:$0xff]
        %v481 = vld [vmem:[%s471 + $0x48] sm:$0xff]
        %v482 = vld [vmem:[%s471 + $0x50] sm:$0xff]
        %v483 = vld [vmem:[%s471 + $0x58] sm:$0xff]
        %v484 = vld [vmem:[%s471 + $0x60] sm:$0xff]
        %v485 = vld [vmem:[%s471 + $0x68] sm:$0xff]
        %v486 = vld [vmem:[%s471 + $0x70] sm:$0xff]
        %v487 = vld [vmem:[%s471 + $0x78] sm:$0xff]
        %v488 = vld [vmem:[%s471 + $0x80] sm:$0xff]
        %v489 = vld [vmem:[%s471 + $0x88] sm:$0xff]
        %v490 = vld [vmem:[%s471 + $0x90] sm:$0xff]
        %v491 = vld [vmem:[%s471 + $0x98] sm:$0xff]
        %v492 = vld [vmem:[%s471 + $0xa0] sm:$0xff]
        %v493 = vld [vmem:[%s471 + $0xa8] sm:$0xff]
        %v494 = vld [vmem:[%s471 + $0xb0] sm:$0xff]
        %v495 = vld [vmem:[%s471 + $0xb8] sm:$0xff]
        %v496 = vld [vmem:[%s471 + $0xc0] sm:$0xff]
        %v497 = vld [vmem:[%s471 + $0xc8] sm:$0xff]
        %v498 = vld [vmem:[%s471 + $0xd0] sm:$0xff]
        %v499 = vld [vmem:[%s471 + $0xd8] sm:$0xff]
        %v500 = vld [vmem:[%s471 + $0xe0] sm:$0xff]
        %v501 = vld [vmem:[%s471 + $0xe8] sm:$0xff]
        %v502 = vld [vmem:[%s471 + $0xf0] sm:$0xff]
        %v503 = vld [vmem:[%s471 + $0xf8] sm:$0xff]
        %v504 = vld [vmem:[%s471 + $0x100] sm:$0xff]
        %v505 = vld [vmem:[%s471 + $0x108] sm:$0xff]
        %v506 = vld [vmem:[%s471 + $0x110] sm:$0xff]
        %v507 = vld [vmem:[%s471 + $0x118] sm:$0xff]
        %v508 = vld [vmem:[%s471 + $0x120] sm:$0xff]
        %v509 = vld [vmem:[%s471 + $0x128] sm:$0xff]
        %v510 = vld [vmem:[%s471 + $0x130] sm:$0xff]
        %v511 = vld [vmem:[%s471 + $0x138] sm:$0xff]
        %v512 = vld [vmem:[%s471 + $0x140] sm:$0xff]
        %v513 = vld [vmem:[%s471 + $0x148] sm:$0xff]
        %v514 = vld [vmem:[%s471 + $0x150] sm:$0xff]
        %v515 = vld [vmem:[%s471 + $0x158] sm:$0xff]
        %v516 = vld [vmem:[%s471 + $0x160] sm:$0xff]
        %v517 = vld [vmem:[%s471 + $0x168] sm:$0xff]
        %v518 = vld [vmem:[%s471 + $0x170] sm:$0xff]
        %v519 = vld [vmem:[%s471 + $0x178] sm:$0xff]
        %v520 = vld [vmem:[%s471 + $0x180] sm:$0xff]
        %v521 = vld [vmem:[%s471 + $0x188] sm:$0xff]
        %v522 = vld [vmem:[%s471 + $0x190] sm:$0xff]
        %v523 = vld [vmem:[%s471 + $0x198] sm:$0xff]
        %v524 = vld [vmem:[%s471 + $0x1a0] sm:$0xff]
        %v525 = vld [vmem:[%s471 + $0x1a8] sm:$0xff]
        %v526 = vld [vmem:[%s471 + $0x1b0] sm:$0xff]
        %v527 = vld [vmem:[%s471 + $0x1b8] sm:$0xff]
        %v528 = vld [vmem:[%s471 + $0x1c0] sm:$0xff]
        %v529 = vld [vmem:[%s471 + $0x1c8] sm:$0xff]
        %v530 = vld [vmem:[%s471 + $0x1d0] sm:$0xff]
        %v531 = vld [vmem:[%s471 + $0x1d8] sm:$0xff]
        %v532 = vld [vmem:[%s471 + $0x1e0] sm:$0xff]
        %v533 = vld [vmem:[%s471 + $0x1e8] sm:$0xff]
        %v534 = vld [vmem:[%s471 + $0x1f0] sm:$0xff]
        %v535 = vld [vmem:[%s471 + $0x1f8] sm:$0xff]
        %v536 = vld [vmem:[%s471 + $0x200] sm:$0xff]
        %v537 = vld [vmem:[%s471 + $0x208] sm:$0xff]
        %v538 = vld [vmem:[%s471 + $0x210] sm:$0xff]
        %v539 = vld [vmem:[%s471 + $0x218] sm:$0xff]
        %v540 = vld [vmem:[%s471 + $0x220] sm:$0xff]
        %v541 = vld [vmem:[%s471 + $0x228] sm:$0xff]
        %v542 = vld [vmem:[%s471 + $0x230] sm:$0xff]
        %v543 = vld [vmem:[%s471 + $0x238] sm:$0xff]
        %v544 = vld [vmem:[%s471 + $0x240] sm:$0xff]
        %v545 = vld [vmem:[%s471 + $0x248] sm:$0xff]
        %v546 = vld [vmem:[%s471 + $0x250] sm:$0xff]
        %v547 = vld [vmem:[%s471 + $0x258] sm:$0xff]
        %v548 = vld [vmem:[%s471 + $0x260] sm:$0xff]
        %v549 = vld [vmem:[%s471 + $0x268] sm:$0xff]
        %v550 = vld [vmem:[%s471 + $0x270] sm:$0xff]
        %v551 = vld [vmem:[%s471 + $0x278] sm:$0xff]
        %v552 = vld [vmem:[%s471 + $0x280] sm:$0xff]
        %v553 = vld [vmem:[%s471 + $0x288] sm:$0xff]
        %v554 = vld [vmem:[%s471 + $0x290] sm:$0xff]
        %v555 = vld [vmem:[%s471 + $0x298] sm:$0xff]
        %v556 = vld [vmem:[%s471 + $0x2a0] sm:$0xff]
        %v557 = vld [vmem:[%s471 + $0x2a8] sm:$0xff]
        %v558 = vld [vmem:[%s471 + $0x2b0] sm:$0xff]
        %v559 = vld [vmem:[%s471 + $0x2b8] sm:$0xff]
        %v560 = vld [vmem:[%s471 + $0x2c0] sm:$0xff]
        %v561 = vld [vmem:[%s471 + $0x2c8] sm:$0xff]
        %v562 = vld [vmem:[%s471 + $0x2d0] sm:$0xff]
        %v563 = vld [vmem:[%s471 + $0x2d8] sm:$0xff]
        %v564 = vld [vmem:[%s471 + $0x2e0] sm:$0xff]
        %v565 = vld [vmem:[%s471 + $0x2e8] sm:$0xff]
        %v566 = vld [vmem:[%s471 + $0x2f0] sm:$0xff]
        %v567 = vld [vmem:[%s471 + $0x2f8] sm:$0xff]
        %vm583 = vcmask 1046528
        %v584 = vrot.slane %v465, 1
        %v585 = vrot.slane %v360, 1
        %v586 = vsel %vm583, %v584, %v585
        %v587 = vrot.slane %v466, 1
        %v588 = vrot.slane %v361, 1
        %v589 = vsel %vm583, %v587, %v588
        %v590 = vrot.slane %v467, 1
        %v591 = vrot.slane %v362, 1
        %v592 = vsel %vm583, %v590, %v591
        %v593 = vrot.slane %v363, 1
        %v594 = vsel %vm583, %v585, %v593
        %v595 = vrot.slane %v364, 1
        %v596 = vsel %vm583, %v588, %v595
        %v597 = vrot.slane %v365, 1
        %v598 = vsel %vm583, %v591, %v597
        %v599 = vrot.slane %v366, 1
        %v600 = vsel %vm583, %v593, %v599
        %v601 = vrot.slane %v367, 1
        %v602 = vsel %vm583, %v595, %v601
        %v603 = vrot.slane %v368, 1
        %v604 = vsel %vm583, %v597, %v603
        %v605 = vrot.slane %v468, 1
        %v606 = vsel %vm583, %v599, %v605
        %v607 = vrot.slane %v469, 1
        %v608 = vsel %vm583, %v601, %v607
        %v609 = vrot.slane %v470, 1
        %v610 = vsel %vm583, %v603, %v609
        %623 = vmatprep.subr.mxu0 %v473
        %624 = vmatpush1.msra.mxu0 %v472
        %625 = vmatprep.subr.mxu0 %v475
        %626 = vmatpush1.msra.mxu0 %v474
        %627 = vmatprep.subr.mxu0 %v477
        %628 = vmatpush1.msra.mxu0 %v476
        %629 = vmatprep.subr.mxu0 %v479
        %630 = vmatpush1.msra.mxu0 %v478
        %631 = vmatprep.subr.mxu0 %v481
        %632 = vmatpush1.msra.mxu0 %v480
        %633 = vmatprep.subr.mxu0 %v483
        %634 = vmatpush1.msra.mxu0 %v482
        %635 = vmatprep.subr.mxu0 %v485
        %636 = vmatpush1.msra.mxu0 %v484
        %637 = vmatprep.subr.mxu0 %v487
        %638 = vmatpush1.msra.mxu0 %v486
        %639 = vmatprep.subr.mxu0 %v489
        %640 = vmatpush1.msra.mxu0 %v488
        %641 = vmatprep.subr.mxu0 %v491
        %642 = vmatpush1.msra.mxu0 %v490
        %643 = vmatprep.subr.mxu0 %v493
        %644 = vmatpush1.msra.mxu0 %v492
        %645 = vmatprep.subr.mxu0 %v495
        %646 = vmatpush1.msra.mxu0 %v494
        %647 = vmatprep.subr.mxu0 %v497
        %648 = vmatpush1.msra.mxu0 %v496
        %649 = vmatprep.subr.mxu0 %v499
        %650 = vmatpush1.msra.mxu0 %v498
        %651 = vmatprep.subr.mxu0 %v501
        %652 = vmatpush1.msra.mxu0 %v500
        %653 = vmatprep.subr.mxu0 %v503
        %654 = vmatpush1.msra.mxu0 %v502
        %655 = vmatprep.subr.mxu0 %v505
        %656 = vmatpush1.msra.mxu0 %v504
        %657 = vmatprep.subr.mxu0 %v507
        %658 = vmatpush1.msra.mxu0 %v506
        %659 = vmatprep.subr.mxu0 %v509
        %660 = vmatpush1.msra.mxu0 %v508
        %661 = vmatprep.subr.mxu0 %v511
        %662 = vmatpush1.msra.mxu0 %v510
        %663 = vmatprep.subr.mxu0 %v513
        %664 = vmatpush1.msra.mxu0 %v512
        %665 = vmatprep.subr.mxu0 %v515
        %666 = vmatpush1.msra.mxu0 %v514
        %667 = vmatprep.subr.mxu0 %v517
        %668 = vmatpush1.msra.mxu0 %v516
        %669 = vmatprep.subr.mxu0 %v519
        %670 = vmatpush1.msra.mxu0 %v518
        %671 = vmatprep.subr.mxu0 %v521
        %672 = vmatpush1.msra.mxu0 %v520
        %673 = vmatprep.subr.mxu0 %v523
        %674 = vmatpush1.msra.mxu0 %v522
        %675 = vmatprep.subr.mxu0 %v525
        %676 = vmatpush1.msra.mxu0 %v524
        %677 = vmatprep.subr.mxu0 %v527
        %678 = vmatpush1.msra.mxu0 %v526
        %679 = vmatprep.subr.mxu0 %v529
        %680 = vmatpush1.msra.mxu0 %v528
        %681 = vmatprep.subr.mxu0 %v531
        %682 = vmatpush1.msra.mxu0 %v530
        %683 = vmatprep.subr.mxu0 %v533
        %684 = vmatpush1.msra.mxu0 %v532
        %685 = vmatprep.subr.mxu0 %v535
        %686 = vmatpush1.msra.mxu0 %v534
        %687 = vmatprep.mubr.f32.mxu0 %v589
        %688 = vmatmul.mubr.f32.gmra.mrb[0].mxu0 %v586
        %v689 = vpop.f32.mrb[0].mxu0
        %v690 = vadd.f32 0.0, %v689
        %v691 = vpop.f32.mrb[0].mxu0
        %v692 = vadd.f32 0.0, %v691
        %693 = vmatprep.mubr.f32.mxu0 %v596
        %694 = vmatmul.mubr.f32.gmra.mrb[0].mxu0 %v594
        %v695 = vpop.f32.mrb[0].mxu0
        %v696 = vadd.f32 0.0, %v695
        %v697 = vpop.f32.mrb[0].mxu0
        %v698 = vadd.f32 0.0, %v697
        %699 = vmatprep.mubr.f32.mxu0 %v602
        %700 = vmatmul.mubr.f32.gmra.mrb[0].mxu0 %v600
        %v701 = vpop.f32.mrb[0].mxu0
        %v702 = vadd.f32 0.0, %v701
        %v703 = vpop.f32.mrb[0].mxu0
        %v704 = vadd.f32 0.0, %v703
        %705 = vmatprep.mubr.f32.mxu0 %v608
        %706 = vmatmul.mubr.f32.gmra.mrb[0].mxu0 %v606
        %v707 = vpop.f32.mrb[0].mxu0
        %v708 = vadd.f32 0.0, %v707
        %v709 = vpop.f32.mrb[0].mxu0
        %v710 = vadd.f32 0.0, %v709
        %711 = vdwg.mxu0
        %712 = vmatprep.subr.mxu0 %v537
        %713 = vmatpush1.msra.mxu0 %v536
        %714 = vmatprep.subr.mxu0 %v539
        %715 = vmatpush1.msra.mxu0 %v538
        %716 = vmatprep.subr.mxu0 %v541
        %717 = vmatpush1.msra.mxu0 %v540
        %718 = vmatprep.subr.mxu0 %v543
        %719 = vmatpush1.msra.mxu0 %v542
        %720 = vmatprep.subr.mxu0 %v545
        %721 = vmatpush1.msra.mxu0 %v544
        %722 = vmatprep.subr.mxu0 %v547
        %723 = vmatpush1.msra.mxu0 %v546
        %724 = vmatprep.subr.mxu0 %v549
        %725 = vmatpush1.msra.mxu0 %v548
        %726 = vmatprep.subr.mxu0 %v551
        %727 = vmatpush1.msra.mxu0 %v550
        %728 = vmatprep.subr.mxu0 %v553
        %729 = vmatpush1.msra.mxu0 %v552
        %730 = vmatprep.subr.mxu0 %v555
        %731 = vmatpush1.msra.mxu0 %v554
        %732 = vmatprep.subr.mxu0 %v557
        %733 = vmatpush1.msra.mxu0 %v556
        %734 = vmatprep.subr.mxu0 %v559
        %735 = vmatpush1.msra.mxu0 %v558
        %736 = vmatprep.subr.mxu0 %v561
        %737 = vmatpush1.msra.mxu0 %v560
        %738 = vmatprep.subr.mxu0 %v563
        %739 = vmatpush1.msra.mxu0 %v562
        %740 = vmatprep.subr.mxu0 %v565
        %741 = vmatpush1.msra.mxu0 %v564
        %742 = vmatprep.subr.mxu0 %v567
        %743 = vmatpush1.msra.mxu0 %v566
        %744 = vmatprep.subr.mxu0 0.0
        %745 = vmatpush1.msra.mxu0 0.0
        %746 = vmatprep.subr.mxu0 0.0
        %747 = vmatpush1.msra.mxu0 0.0
        %748 = vmatprep.subr.mxu0 0.0
        %749 = vmatpush1.msra.mxu0 0.0
        %750 = vmatprep.subr.mxu0 0.0
        %751 = vmatpush1.msra.mxu0 0.0
        %752 = vmatprep.subr.mxu0 0.0
        %753 = vmatpush1.msra.mxu0 0.0
        %754 = vmatprep.subr.mxu0 0.0
        %755 = vmatpush1.msra.mxu0 0.0
        %756 = vmatprep.subr.mxu0 0.0
        %757 = vmatpush1.msra.mxu0 0.0
        %758 = vmatprep.subr.mxu0 0.0
        %759 = vmatpush1.msra.mxu0 0.0
        %760 = vmatprep.subr.mxu0 0.0
        %761 = vmatpush1.msra.mxu0 0.0
        %762 = vmatprep.subr.mxu0 0.0
        %763 = vmatpush1.msra.mxu0 0.0
        %764 = vmatprep.subr.mxu0 0.0
        %765 = vmatpush1.msra.mxu0 0.0
        %766 = vmatprep.subr.mxu0 0.0
        %767 = vmatpush1.msra.mxu0 0.0
        %768 = vmatprep.subr.mxu0 0.0
        %769 = vmatpush1.msra.mxu0 0.0
        %770 = vmatprep.subr.mxu0 0.0
        %771 = vmatpush1.msra.mxu0 0.0
        %772 = vmatprep.subr.mxu0 0.0
        %773 = vmatpush1.msra.mxu0 0.0
        %774 = vmatprep.subr.mxu0 0.0
        %775 = vmatpush1.msra.mxu0 0.0
        %776 = vmatprep.mubr.f32.mxu0 0.0
        %777 = vmatmul.mubr.f32.gmra.mrb[0].mxu0 %v592
        %v778 = vpop.f32.mrb[0].mxu0
        %v779 = vadd.f32 %v690, %v778
        %v780 = vpop.f32.mrb[0].mxu0
        %v781 = vadd.f32 %v692, %v780
        %782 = vmatprep.mubr.f32.mxu0 0.0
        %783 = vmatmul.mubr.f32.gmra.mrb[0].mxu0 %v598
        %v784 = vpop.f32.mrb[0].mxu0
        %v785 = vadd.f32 %v696, %v784
        %v786 = vpop.f32.mrb[0].mxu0
        %v787 = vadd.f32 %v698, %v786
        %788 = vmatprep.mubr.f32.mxu0 0.0
        %789 = vmatmul.mubr.f32.gmra.mrb[0].mxu0 %v604
        %v790 = vpop.f32.mrb[0].mxu0
        %v791 = vadd.f32 %v702, %v790
        %v792 = vpop.f32.mrb[0].mxu0
        %v793 = vadd.f32 %v704, %v792
        %794 = vmatprep.mubr.f32.mxu0 0.0
        %795 = vmatmul.mubr.f32.gmra.mrb[0].mxu0 %v610
        %v796 = vpop.f32.mrb[0].mxu0
        %v797 = vadd.f32 %v708, %v796
        %v798 = vpop.f32.mrb[0].mxu0
        %v799 = vadd.f32 %v710, %v798
        %800 = vdwg.mxu0
        %801 = vmatprep.subr.mxu0 %v370
        %802 = vmatpush1.msra.mxu0 %v369
        %803 = vmatprep.subr.mxu0 %v372
        %804 = vmatpush1.msra.mxu0 %v371
        %805 = vmatprep.subr.mxu0 %v374
        %806 = vmatpush1.msra.mxu0 %v373
        %807 = vmatprep.subr.mxu0 %v376
        %808 = vmatpush1.msra.mxu0 %v375
        %809 = vmatprep.subr.mxu0 %v378
        %810 = vmatpush1.msra.mxu0 %v377
        %811 = vmatprep.subr.mxu0 %v380
        %812 = vmatpush1.msra.mxu0 %v379
        %813 = vmatprep.subr.mxu0 %v382
        %814 = vmatpush1.msra.mxu0 %v381
        %815 = vmatprep.subr.mxu0 %v384
        %816 = vmatpush1.msra.mxu0 %v383
        %817 = vmatprep.subr.mxu0 %v386
        %818 = vmatpush1.msra.mxu0 %v385
        %819 = vmatprep.subr.mxu0 %v388
        %820 = vmatpush1.msra.mxu0 %v387
        %821 = vmatprep.subr.mxu0 %v390
        %822 = vmatpush1.msra.mxu0 %v389
        %823 = vmatprep.subr.mxu0 %v392
        %824 = vmatpush1.msra.mxu0 %v391
        %825 = vmatprep.subr.mxu0 %v394
        %826 = vmatpush1.msra.mxu0 %v393
        %827 = vmatprep.subr.mxu0 %v396
        %828 = vmatpush1.msra.mxu0 %v395
        %829 = vmatprep.subr.mxu0 %v398
        %830 = vmatpush1.msra.mxu0 %v397
        %831 = vmatprep.subr.mxu0 %v400
        %832 = vmatpush1.msra.mxu0 %v399
        %833 = vmatprep.subr.mxu0 %v402
        %834 = vmatpush1.msra.mxu0 %v401
        %835 = vmatprep.subr.mxu0 %v404
        %836 = vmatpush1.msra.mxu0 %v403
        %837 = vmatprep.subr.mxu0 %v406
        %838 = vmatpush1.msra.mxu0 %v405
        %839 = vmatprep.subr.mxu0 %v408
        %840 = vmatpush1.msra.mxu0 %v407
        %841 = vmatprep.subr.mxu0 %v410
        %842 = vmatpush1.msra.mxu0 %v409
        %843 = vmatprep.subr.mxu0 %v412
        %844 = vmatpush1.msra.mxu0 %v411
        %845 = vmatprep.subr.mxu0 %v414
        %846 = vmatpush1.msra.mxu0 %v413
        %847 = vmatprep.subr.mxu0 %v416
        %848 = vmatpush1.msra.mxu0 %v415
        %849 = vmatprep.subr.mxu0 %v418
        %850 = vmatpush1.msra.mxu0 %v417
        %851 = vmatprep.subr.mxu0 %v420
        %852 = vmatpush1.msra.mxu0 %v419
        %853 = vmatprep.subr.mxu0 %v422
        %854 = vmatpush1.msra.mxu0 %v421
        %855 = vmatprep.subr.mxu0 %v424
        %856 = vmatpush1.msra.mxu0 %v423
        %857 = vmatprep.subr.mxu0 %v426
        %858 = vmatpush1.msra.mxu0 %v425
        %859 = vmatprep.subr.mxu0 %v428
        %860 = vmatpush1.msra.mxu0 %v427
        %861 = vmatprep.subr.mxu0 %v430
        %862 = vmatpush1.msra.mxu0 %v429
        %863 = vmatprep.subr.mxu0 %v432
        %864 = vmatpush1.msra.mxu0 %v431
        %865 = vmatprep.mubr.f32.mxu0 %v358
        %866 = vmatmul.mubr.f32.gmra.mrb[0].mxu0 %v357
        %v867 = vpop.f32.mrb[0].mxu0
        %v868 = vadd.f32 %v779, %v867
        %v869 = vpop.f32.mrb[0].mxu0
        %v870 = vadd.f32 %v781, %v869
        %871 = vmatprep.mubr.f32.mxu0 %v361
        %872 = vmatmul.mubr.f32.gmra.mrb[0].mxu0 %v360
        %v873 = vpop.f32.mrb[0].mxu0
        %v874 = vadd.f32 %v785, %v873
        %v875 = vpop.f32.mrb[0].mxu0
        %v876 = vadd.f32 %v787, %v875
        %877 = vmatprep.mubr.f32.mxu0 %v364
        %878 = vmatmul.mubr.f32.gmra.mrb[0].mxu0 %v363
        %v879 = vpop.f32.mrb[0].mxu0
        %v880 = vadd.f32 %v791, %v879
        %v881 = vpop.f32.mrb[0].mxu0
        %v882 = vadd.f32 %v793, %v881
        %883 = vmatprep.mubr.f32.mxu0 %v367
        %884 = vmatmul.mubr.f32.gmra.mrb[0].mxu0 %v366
        %v885 = vpop.f32.mrb[0].mxu0
        %v886 = vadd.f32 %v797, %v885
        %v887 = vpop.f32.mrb[0].mxu0
        %v888 = vadd.f32 %v799, %v887
        %889 = vdwg.mxu0
        %890 = vmatprep.subr.mxu0 %v434
        %891 = vmatpush1.msra.mxu0 %v433
        %892 = vmatprep.subr.mxu0 %v436
        %893 = vmatpush1.msra.mxu0 %v435
        %894 = vmatprep.subr.mxu0 %v438
        %895 = vmatpush1.msra.mxu0 %v437
        %896 = vmatprep.subr.mxu0 %v440
        %897 = vmatpush1.msra.mxu0 %v439
        %898 = vmatprep.subr.mxu0 %v442
        %899 = vmatpush1.msra.mxu0 %v441
        %900 = vmatprep.subr.mxu0 %v444
        %901 = vmatpush1.msra.mxu0 %v443
        %902 = vmatprep.subr.mxu0 %v446
        %903 = vmatpush1.msra.mxu0 %v445
        %904 = vmatprep.subr.mxu0 %v448
        %905 = vmatpush1.msra.mxu0 %v447
        %906 = vmatprep.subr.mxu0 %v450
        %907 = vmatpush1.msra.mxu0 %v449
        %908 = vmatprep.subr.mxu0 %v452
        %909 = vmatpush1.msra.mxu0 %v451
        %910 = vmatprep.subr.mxu0 %v454
        %911 = vmatpush1.msra.mxu0 %v453
        %912 = vmatprep.subr.mxu0 %v456
        %913 = vmatpush1.msra.mxu0 %v455
        %914 = vmatprep.subr.mxu0 %v458
        %915 = vmatpush1.msra.mxu0 %v457
        %916 = vmatprep.subr.mxu0 %v460
        %917 = vmatpush1.msra.mxu0 %v459
        %918 = vmatprep.subr.mxu0 %v462
        %919 = vmatpush1.msra.mxu0 %v461
        %920 = vmatprep.subr.mxu0 %v464
        %921 = vmatpush1.msra.mxu0 %v463
        %922 = vmatprep.subr.mxu0 0.0
        %923 = vmatpush1.msra.mxu0 0.0
        %924 = vmatprep.subr.mxu0 0.0
        %925 = vmatpush1.msra.mxu0 0.0
        %926 = vmatprep.subr.mxu0 0.0
        %927 = vmatpush1.msra.mxu0 0.0
        %928 = vmatprep.subr.mxu0 0.0
        %929 = vmatpush1.msra.mxu0 0.0
        %930 = vmatprep.subr.mxu0 0.0
        %931 = vmatpush1.msra.mxu0 0.0
        %932 = vmatprep.subr.mxu0 0.0
        %933 = vmatpush1.msra.mxu0 0.0
        %934 = vmatprep.subr.mxu0 0.0
        %935 = vmatpush1.msra.mxu0 0.0
        %936 = vmatprep.subr.mxu0 0.0
        %937 = vmatpush1.msra.mxu0 0.0
        %938 = vmatprep.subr.mxu0 0.0
        %939 = vmatpush1.msra.mxu0 0.0
        %940 = vmatprep.subr.mxu0 0.0
        %941 = vmatpush1.msra.mxu0 0.0
        %942 = vmatprep.subr.mxu0 0.0
        %943 = vmatpush1.msra.mxu0 0.0
        %944 = vmatprep.subr.mxu0 0.0
        %945 = vmatpush1.msra.mxu0 0.0
        %946 = vmatprep.subr.mxu0 0.0
        %947 = vmatpush1.msra.mxu0 0.0
        %948 = vmatprep.subr.mxu0 0.0
        %949 = vmatpush1.msra.mxu0 0.0
        %950 = vmatprep.subr.mxu0 0.0
        %951 = vmatpush1.msra.mxu0 0.0
        %952 = vmatprep.subr.mxu0 0.0
        %953 = vmatpush1.msra.mxu0 0.0
        %954 = vmatprep.mubr.f32.mxu0 0.0
        %955 = vmatmul.mubr.f32.gmra.mrb[0].mxu0 %v359
        %v956 = vpop.f32.mrb[0].mxu0
        %v957 = vadd.f32 %v868, %v956
        %v958 = vpop.f32.mrb[0].mxu0
        %v959 = vadd.f32 %v870, %v958
        %960 = vmatprep.mubr.f32.mxu0 0.0
        %961 = vmatmul.mubr.f32.gmra.mrb[0].mxu0 %v362
        %v962 = vpop.f32.mrb[0].mxu0
        %v963 = vadd.f32 %v874, %v962
        %v964 = vpop.f32.mrb[0].mxu0
        %v965 = vadd.f32 %v876, %v964
        %966 = vmatprep.mubr.f32.mxu0 0.0
        %967 = vmatmul.mubr.f32.gmra.mrb[0].mxu0 %v365
        %v968 = vpop.f32.mrb[0].mxu0
        %v969 = vadd.f32 %v880, %v968
        %v970 = vpop.f32.mrb[0].mxu0
        %v971 = vadd.f32 %v882, %v970
        %972 = vmatprep.mubr.f32.mxu0 0.0
        %973 = vmatmul.mubr.f32.gmra.mrb[0].mxu0 %v368
        %v974 = vpop.f32.mrb[0].mxu0
        %v975 = vadd.f32 %v886, %v974
        %v976 = vpop.f32.mrb[0].mxu0
        %v977 = vadd.f32 %v888, %v976
        %978 = vdwg.mxu0
        %v979 = vld [vmem:[%s356] sm:$0xfc]
        %v980 = vld [vmem:[%s356 + $0x8] sm:$0xfc]
        %v981 = vld [vmem:[%s356 + $0x10] sm:$0xfc]
        %v982 = vld [vmem:[%s356 + $0x60] sm:$0x3]
        %v983 = vld [vmem:[%s356 + $0x68] sm:$0x3]
        %v984 = vld [vmem:[%s356 + $0x70] sm:$0x3]
        %s985 = scalar_lea.vmem [#allocation3], 1536
        %v986 = vld [vmem:[%s985] sm:$0xff]
        %v987 = vld [vmem:[%s985 + $0x8] sm:$0xff]
        %v988 = vld [vmem:[%s985 + $0x10] sm:$0xff]
        %v989 = vld [vmem:[%s985 + $0x18] sm:$0xff]
        %v990 = vld [vmem:[%s985 + $0x20] sm:$0xff]
        %v991 = vld [vmem:[%s985 + $0x28] sm:$0xff]
        %v992 = vld [vmem:[%s985 + $0x30] sm:$0xff]
        %v993 = vld [vmem:[%s985 + $0x38] sm:$0xff]
        %v994 = vld [vmem:[%s985 + $0x40] sm:$0xff]
        %v995 = vld [vmem:[%s985 + $0x48] sm:$0xff]
        %v996 = vld [vmem:[%s985 + $0x50] sm:$0xff]
        %v997 = vld [vmem:[%s985 + $0x58] sm:$0xff]
        %v998 = vld [vmem:[%s985 + $0x60] sm:$0xff]
        %v999 = vld [vmem:[%s985 + $0x68] sm:$0xff]
        %v1000 = vld [vmem:[%s985 + $0x70] sm:$0xff]
        %v1001 = vld [vmem:[%s985 + $0x78] sm:$0xff]
        %v1002 = vld [vmem:[%s985 + $0x80] sm:$0xff]
        %v1003 = vld [vmem:[%s985 + $0x88] sm:$0xff]
        %v1004 = vld [vmem:[%s985 + $0x90] sm:$0xff]
        %v1005 = vld [vmem:[%s985 + $0x98] sm:$0xff]
        %v1006 = vld [vmem:[%s985 + $0xa0] sm:$0xff]
        %v1007 = vld [vmem:[%s985 + $0xa8] sm:$0xff]
        %v1008 = vld [vmem:[%s985 + $0xb0] sm:$0xff]
        %v1009 = vld [vmem:[%s985 + $0xb8] sm:$0xff]
        %v1010 = vld [vmem:[%s985 + $0xc0] sm:$0xff]
        %v1011 = vld [vmem:[%s985 + $0xc8] sm:$0xff]
        %v1012 = vld [vmem:[%s985 + $0xd0] sm:$0xff]
        %v1013 = vld [vmem:[%s985 + $0xd8] sm:$0xff]
        %v1014 = vld [vmem:[%s985 + $0xe0] sm:$0xff]
        %v1015 = vld [vmem:[%s985 + $0xe8] sm:$0xff]
        %v1016 = vld [vmem:[%s985 + $0xf0] sm:$0xff]
        %v1017 = vld [vmem:[%s985 + $0xf8] sm:$0xff]
        %v1018 = vld [vmem:[%s985 + $0x100] sm:$0xff]
        %v1019 = vld [vmem:[%s985 + $0x108] sm:$0xff]
        %v1020 = vld [vmem:[%s985 + $0x110] sm:$0xff]
        %v1021 = vld [vmem:[%s985 + $0x118] sm:$0xff]
        %v1022 = vld [vmem:[%s985 + $0x120] sm:$0xff]
        %v1023 = vld [vmem:[%s985 + $0x128] sm:$0xff]
        %v1024 = vld [vmem:[%s985 + $0x130] sm:$0xff]
        %v1025 = vld [vmem:[%s985 + $0x138] sm:$0xff]
        %v1026 = vld [vmem:[%s985 + $0x140] sm:$0xff]
        %v1027 = vld [vmem:[%s985 + $0x148] sm:$0xff]
        %v1028 = vld [vmem:[%s985 + $0x150] sm:$0xff]
        %v1029 = vld [vmem:[%s985 + $0x158] sm:$0xff]
        %v1030 = vld [vmem:[%s985 + $0x160] sm:$0xff]
        %v1031 = vld [vmem:[%s985 + $0x168] sm:$0xff]
        %v1032 = vld [vmem:[%s985 + $0x170] sm:$0xff]
        %v1033 = vld [vmem:[%s985 + $0x178] sm:$0xff]
        %v1034 = vld [vmem:[%s985 + $0x180] sm:$0xff]
        %v1035 = vld [vmem:[%s985 + $0x188] sm:$0xff]
        %v1036 = vld [vmem:[%s985 + $0x190] sm:$0xff]
        %v1037 = vld [vmem:[%s985 + $0x198] sm:$0xff]
        %v1038 = vld [vmem:[%s985 + $0x1a0] sm:$0xff]
        %v1039 = vld [vmem:[%s985 + $0x1a8] sm:$0xff]
        %v1040 = vld [vmem:[%s985 + $0x1b0] sm:$0xff]
        %v1041 = vld [vmem:[%s985 + $0x1b8] sm:$0xff]
        %v1042 = vld [vmem:[%s985 + $0x1c0] sm:$0xff]
        %v1043 = vld [vmem:[%s985 + $0x1c8] sm:$0xff]
        %v1044 = vld [vmem:[%s985 + $0x1d0] sm:$0xff]
        %v1045 = vld [vmem:[%s985 + $0x1d8] sm:$0xff]
        %v1046 = vld [vmem:[%s985 + $0x1e0] sm:$0xff]
        %v1047 = vld [vmem:[%s985 + $0x1e8] sm:$0xff]
        %v1048 = vld [vmem:[%s985 + $0x1f0] sm:$0xff]
        %v1049 = vld [vmem:[%s985 + $0x1f8] sm:$0xff]
        %v1050 = vld [vmem:[%s985 + $0x200] sm:$0xff]
        %v1051 = vld [vmem:[%s985 + $0x208] sm:$0xff]
        %v1052 = vld [vmem:[%s985 + $0x210] sm:$0xff]
        %v1053 = vld [vmem:[%s985 + $0x218] sm:$0xff]
        %v1054 = vld [vmem:[%s985 + $0x220] sm:$0xff]
        %v1055 = vld [vmem:[%s985 + $0x228] sm:$0xff]
        %v1056 = vld [vmem:[%s985 + $0x230] sm:$0xff]
        %v1057 = vld [vmem:[%s985 + $0x238] sm:$0xff]
        %v1058 = vld [vmem:[%s985 + $0x240] sm:$0xff]
        %v1059 = vld [vmem:[%s985 + $0x248] sm:$0xff]
        %v1060 = vld [vmem:[%s985 + $0x250] sm:$0xff]
        %v1061 = vld [vmem:[%s985 + $0x258] sm:$0xff]
        %v1062 = vld [vmem:[%s985 + $0x260] sm:$0xff]
        %v1063 = vld [vmem:[%s985 + $0x268] sm:$0xff]
        %v1064 = vld [vmem:[%s985 + $0x270] sm:$0xff]
        %v1065 = vld [vmem:[%s985 + $0x278] sm:$0xff]
        %v1066 = vld [vmem:[%s985 + $0x280] sm:$0xff]
        %v1067 = vld [vmem:[%s985 + $0x288] sm:$0xff]
        %v1068 = vld [vmem:[%s985 + $0x290] sm:$0xff]
        %v1069 = vld [vmem:[%s985 + $0x298] sm:$0xff]
        %v1070 = vld [vmem:[%s985 + $0x2a0] sm:$0xff]
        %v1071 = vld [vmem:[%s985 + $0x2a8] sm:$0xff]
        %v1072 = vld [vmem:[%s985 + $0x2b0] sm:$0xff]
        %v1073 = vld [vmem:[%s985 + $0x2b8] sm:$0xff]
        %v1074 = vld [vmem:[%s985 + $0x2c0] sm:$0xff]
        %v1075 = vld [vmem:[%s985 + $0x2c8] sm:$0xff]
        %v1076 = vld [vmem:[%s985 + $0x2d0] sm:$0xff]
        %v1077 = vld [vmem:[%s985 + $0x2d8] sm:$0xff]
        %v1078 = vld [vmem:[%s985 + $0x2e0] sm:$0xff]
        %v1079 = vld [vmem:[%s985 + $0x2e8] sm:$0xff]
        %v1080 = vld [vmem:[%s985 + $0x2f0] sm:$0xff]
        %v1081 = vld [vmem:[%s985 + $0x2f8] sm:$0xff]
        %vm1088 = vcmask 1045504
        %v1089 = vrot.slane %v979, 2
        %v1090 = vrot.slane %v360, 2
        %v1091 = vsel %vm1088, %v1089, %v1090
        %v1092 = vrot.slane %v980, 2
        %v1093 = vrot.slane %v361, 2
        %v1094 = vsel %vm1088, %v1092, %v1093
        %v1095 = vrot.slane %v981, 2
        %v1096 = vrot.slane %v362, 2
        %v1097 = vsel %vm1088, %v1095, %v1096
        %v1098 = vrot.slane %v363, 2
        %v1099 = vsel %vm1088, %v1090, %v1098
        %v1100 = vrot.slane %v364, 2
        %v1101 = vsel %vm1088, %v1093, %v1100
        %v1102 = vrot.slane %v365, 2
        %v1103 = vsel %vm1088, %v1096, %v1102
        %v1104 = vrot.slane %v366, 2
        %v1105 = vsel %vm1088, %v1098, %v1104
        %v1106 = vrot.slane %v367, 2
        %v1107 = vsel %vm1088, %v1100, %v1106
        %v1108 = vrot.slane %v368, 2
        %v1109 = vsel %vm1088, %v1102, %v1108
        %v1110 = vrot.slane %v982, 2
        %v1111 = vsel %vm1088, %v1104, %v1110
        %v1112 = vrot.slane %v983, 2
        %v1113 = vsel %vm1088, %v1106, %v1112
        %v1114 = vrot.slane %v984, 2
        %v1115 = vsel %vm1088, %v1108, %v1114
        %1128 = vmatprep.subr.mxu0 %v987
        %1129 = vmatpush1.msra.mxu0 %v986
        %1130 = vmatprep.subr.mxu0 %v989
        %1131 = vmatpush1.msra.mxu0 %v988
        %1132 = vmatprep.subr.mxu0 %v991
        %1133 = vmatpush1.msra.mxu0 %v990
        %1134 = vmatprep.subr.mxu0 %v993
        %1135 = vmatpush1.msra.mxu0 %v992
        %1136 = vmatprep.subr.mxu0 %v995
        %1137 = vmatpush1.msra.mxu0 %v994
        %1138 = vmatprep.subr.mxu0 %v997
        %1139 = vmatpush1.msra.mxu0 %v996
        %1140 = vmatprep.subr.mxu0 %v999
        %1141 = vmatpush1.msra.mxu0 %v998
        %1142 = vmatprep.subr.mxu0 %v1001
        %1143 = vmatpush1.msra.mxu0 %v1000
        %1144 = vmatprep.subr.mxu0 %v1003
        %1145 = vmatpush1.msra.mxu0 %v1002
        %1146 = vmatprep.subr.mxu0 %v1005
        %1147 = vmatpush1.msra.mxu0 %v1004
        %1148 = vmatprep.subr.mxu0 %v1007
        %1149 = vmatpush1.msra.mxu0 %v1006
        %1150 = vmatprep.subr.mxu0 %v1009
        %1151 = vmatpush1.msra.mxu0 %v1008
        %1152 = vmatprep.subr.mxu0 %v1011
        %1153 = vmatpush1.msra.mxu0 %v1010
        %1154 = vmatprep.subr.mxu0 %v1013
        %1155 = vmatpush1.msra.mxu0 %v1012
        %1156 = vmatprep.subr.mxu0 %v1015
        %1157 = vmatpush1.msra.mxu0 %v1014
        %1158 = vmatprep.subr.mxu0 %v1017
        %1159 = vmatpush1.msra.mxu0 %v1016
        %1160 = vmatprep.subr.mxu0 %v1019
        %1161 = vmatpush1.msra.mxu0 %v1018
        %1162 = vmatprep.subr.mxu0 %v1021
        %1163 = vmatpush1.msra.mxu0 %v1020
        %1164 = vmatprep.subr.mxu0 %v1023
        %1165 = vmatpush1.msra.mxu0 %v1022
        %1166 = vmatprep.subr.mxu0 %v1025
        %1167 = vmatpush1.msra.mxu0 %v1024
        %1168 = vmatprep.subr.mxu0 %v1027
        %1169 = vmatpush1.msra.mxu0 %v1026
        %1170 = vmatprep.subr.mxu0 %v1029
        %1171 = vmatpush1.msra.mxu0 %v1028
        %1172 = vmatprep.subr.mxu0 %v1031
        %1173 = vmatpush1.msra.mxu0 %v1030
        %1174 = vmatprep.subr.mxu0 %v1033
        %1175 = vmatpush1.msra.mxu0 %v1032
        %1176 = vmatprep.subr.mxu0 %v1035
        %1177 = vmatpush1.msra.mxu0 %v1034
        %1178 = vmatprep.subr.mxu0 %v1037
        %1179 = vmatpush1.msra.mxu0 %v1036
        %1180 = vmatprep.subr.mxu0 %v1039
        %1181 = vmatpush1.msra.mxu0 %v1038
        %1182 = vmatprep.subr.mxu0 %v1041
        %1183 = vmatpush1.msra.mxu0 %v1040
        %1184 = vmatprep.subr.mxu0 %v1043
        %1185 = vmatpush1.msra.mxu0 %v1042
        %1186 = vmatprep.subr.mxu0 %v1045
        %1187 = vmatpush1.msra.mxu0 %v1044
        %1188 = vmatprep.subr.mxu0 %v1047
        %1189 = vmatpush1.msra.mxu0 %v1046
        %1190 = vmatprep.subr.mxu0 %v1049
        %1191 = vmatpush1.msra.mxu0 %v1048
        %1192 = vmatprep.mubr.f32.mxu0 %v1094
        %1193 = vmatmul.mubr.f32.gmra.mrb[0].mxu0 %v1091
        %v1194 = vpop.f32.mrb[0].mxu0
        %v1195 = vadd.f32 0.0, %v1194
        %v1196 = vpop.f32.mrb[0].mxu0
        %v1197 = vadd.f32 0.0, %v1196
        %1198 = vmatprep.mubr.f32.mxu0 %v1101
        %1199 = vmatmul.mubr.f32.gmra.mrb[0].mxu0 %v1099
        %v1200 = vpop.f32.mrb[0].mxu0
        %v1201 = vadd.f32 0.0, %v1200
        %v1202 = vpop.f32.mrb[0].mxu0
        %v1203 = vadd.f32 0.0, %v1202
        %1204 = vmatprep.mubr.f32.mxu0 %v1107
        %1205 = vmatmul.mubr.f32.gmra.mrb[0].mxu0 %v1105
        %v1206 = vpop.f32.mrb[0].mxu0
        %v1207 = vadd.f32 0.0, %v1206
        %v1208 = vpop.f32.mrb[0].mxu0
        %v1209 = vadd.f32 0.0, %v1208
        %1210 = vmatprep.mubr.f32.mxu0 %v1113
        %1211 = vmatmul.mubr.f32.gmra.mrb[0].mxu0 %v1111
        %v1212 = vpop.f32.mrb[0].mxu0
        %v1213 = vadd.f32 0.0, %v1212
        %v1214 = vpop.f32.mrb[0].mxu0
        %v1215 = vadd.f32 0.0, %v1214
        %1216 = vdwg.mxu0
        %1217 = vmatprep.subr.mxu0 %v1051
        %1218 = vmatpush1.msra.mxu0 %v1050
        %1219 = vmatprep.subr.mxu0 %v1053
        %1220 = vmatpush1.msra.mxu0 %v1052
        %1221 = vmatprep.subr.mxu0 %v1055
        %1222 = vmatpush1.msra.mxu0 %v1054
        %1223 = vmatprep.subr.mxu0 %v1057
        %1224 = vmatpush1.msra.mxu0 %v1056
        %1225 = vmatprep.subr.mxu0 %v1059
        %1226 = vmatpush1.msra.mxu0 %v1058
        %1227 = vmatprep.subr.mxu0 %v1061
        %1228 = vmatpush1.msra.mxu0 %v1060
        %1229 = vmatprep.subr.mxu0 %v1063
        %1230 = vmatpush1.msra.mxu0 %v1062
        %1231 = vmatprep.subr.mxu0 %v1065
        %1232 = vmatpush1.msra.mxu0 %v1064
        %1233 = vmatprep.subr.mxu0 %v1067
        %1234 = vmatpush1.msra.mxu0 %v1066
        %1235 = vmatprep.subr.mxu0 %v1069
        %1236 = vmatpush1.msra.mxu0 %v1068
        %1237 = vmatprep.subr.mxu0 %v1071
        %1238 = vmatpush1.msra.mxu0 %v1070
        %1239 = vmatprep.subr.mxu0 %v1073
        %1240 = vmatpush1.msra.mxu0 %v1072
        %1241 = vmatprep.subr.mxu0 %v1075
        %1242 = vmatpush1.msra.mxu0 %v1074
        %1243 = vmatprep.subr.mxu0 %v1077
        %1244 = vmatpush1.msra.mxu0 %v1076
        %1245 = vmatprep.subr.mxu0 %v1079
        %1246 = vmatpush1.msra.mxu0 %v1078
        %1247 = vmatprep.subr.mxu0 %v1081
        %1248 = vmatpush1.msra.mxu0 %v1080
        %1249 = vmatprep.subr.mxu0 0.0
        %1250 = vmatpush1.msra.mxu0 0.0
        %1251 = vmatprep.subr.mxu0 0.0
        %1252 = vmatpush1.msra.mxu0 0.0
        %1253 = vmatprep.subr.mxu0 0.0
        %1254 = vmatpush1.msra.mxu0 0.0
        %1255 = vmatprep.subr.mxu0 0.0
        %1256 = vmatpush1.msra.mxu0 0.0
        %1257 = vmatprep.subr.mxu0 0.0
        %1258 = vmatpush1.msra.mxu0 0.0
        %1259 = vmatprep.subr.mxu0 0.0
        %1260 = vmatpush1.msra.mxu0 0.0
        %1261 = vmatprep.subr.mxu0 0.0
        %1262 = vmatpush1.msra.mxu0 0.0
        %1263 = vmatprep.subr.mxu0 0.0
        %1264 = vmatpush1.msra.mxu0 0.0
        %1265 = vmatprep.subr.mxu0 0.0
        %1266 = vmatpush1.msra.mxu0 0.0
        %1267 = vmatprep.subr.mxu0 0.0
        %1268 = vmatpush1.msra.mxu0 0.0
        %1269 = vmatprep.subr.mxu0 0.0
        %1270 = vmatpush1.msra.mxu0 0.0
        %1271 = vmatprep.subr.mxu0 0.0
        %1272 = vmatpush1.msra.mxu0 0.0
        %1273 = vmatprep.subr.mxu0 0.0
        %1274 = vmatpush1.msra.mxu0 0.0
        %1275 = vmatprep.subr.mxu0 0.0
        %1276 = vmatpush1.msra.mxu0 0.0
        %1277 = vmatprep.subr.mxu0 0.0
        %1278 = vmatpush1.msra.mxu0 0.0
        %1279 = vmatprep.subr.mxu0 0.0
        %1280 = vmatpush1.msra.mxu0 0.0
        %1281 = vmatprep.mubr.f32.mxu0 0.0
        %1282 = vmatmul.mubr.f32.gmra.mrb[0].mxu0 %v1097
        %v1283 = vpop.f32.mrb[0].mxu0
        %v1284 = vadd.f32 %v1195, %v1283
        %v1285 = vpop.f32.mrb[0].mxu0
        %v1286 = vadd.f32 %v1197, %v1285
        %1287 = vmatprep.mubr.f32.mxu0 0.0
        %1288 = vmatmul.mubr.f32.gmra.mrb[0].mxu0 %v1103
        %v1289 = vpop.f32.mrb[0].mxu0
        %v1290 = vadd.f32 %v1201, %v1289
        %v1291 = vpop.f32.mrb[0].mxu0
        %v1292 = vadd.f32 %v1203, %v1291
        %1293 = vmatprep.mubr.f32.mxu0 0.0
        %1294 = vmatmul.mubr.f32.gmra.mrb[0].mxu0 %v1109
        %v1295 = vpop.f32.mrb[0].mxu0
        %v1296 = vadd.f32 %v1207, %v1295
        %v1297 = vpop.f32.mrb[0].mxu0
        %v1298 = vadd.f32 %v1209, %v1297
        %1299 = vmatprep.mubr.f32.mxu0 0.0
        %1300 = vmatmul.mubr.f32.gmra.mrb[0].mxu0 %v1115
        %v1301 = vpop.f32.mrb[0].mxu0
        %v1302 = vadd.f32 %v1213, %v1301
        %v1303 = vpop.f32.mrb[0].mxu0
        %v1304 = vadd.f32 %v1215, %v1303
        %1305 = vdwg.mxu0
        %v1306 = vadd.f32 %v957, %v1284
        %v1307 = vadd.f32 %v959, %v1286
        %v1308 = vadd.f32 %v963, %v1290
        %v1309 = vadd.f32 %v965, %v1292
        %v1310 = vadd.f32 %v969, %v1296
        %v1311 = vadd.f32 %v971, %v1298
        %v1312 = vadd.f32 %v975, %v1302
        %v1313 = vadd.f32 %v977, %v1304
        %v1314 = vld [vmem:[#allocation8] sm:$0x3]
        %v1316 = vlaneseq
        %v1317 = vshrl.u32 %v1316, 7
        %v1318 = vsub.s32 0, %v1317
        %v1319 = vrot.slane %v1314, %v1318
        %v1320 = vlaneseq
        %v1321 = vshrl.u32 %v1320, 7
        %v1322 = vsub.s32 1, %v1321
        %v1323 = vrot.slane %v1314, %v1322
        %v1326 = vmul.f32 %v1306, %v1319
        %v1327 = vmul.f32 %v1307, %v1323
        %v1328 = vmul.f32 %v1308, %v1319
        %v1329 = vmul.f32 %v1309, %v1323
        %v1330 = vmul.f32 %v1310, %v1319
        %v1331 = vmul.f32 %v1311, %v1323
        %v1332 = vmul.f32 %v1312, %v1319
        %v1333 = vmul.f32 %v1313, %v1323
        %v1334 = vld [vmem:[#allocation9] sm:$0x3]
        %v1336 = vlaneseq
        %v1337 = vshrl.u32 %v1336, 7
        %v1338 = vsub.s32 0, %v1337
        %v1339 = vrot.slane %v1334, %v1338
        %v1340 = vlaneseq
        %v1341 = vshrl.u32 %v1340, 7
        %v1342 = vsub.s32 1, %v1341
        %v1343 = vrot.slane %v1334, %v1342
        %v1346 = vadd.f32 %v1326, %v1339
        %v1347 = vadd.f32 %v1327, %v1343
        %v1348 = vadd.f32 %v1328, %v1339
        %v1349 = vadd.f32 %v1329, %v1343
        %v1350 = vadd.f32 %v1330, %v1339
        %v1351 = vadd.f32 %v1331, %v1343
        %v1352 = vadd.f32 %v1332, %v1339
        %v1353 = vadd.f32 %v1333, %v1343
        %v1354 = vmax.f32 %v1346, 0.0
        %v1355 = vmax.f32 %v1347, 0.0
        %v1356 = vmax.f32 %v1348, 0.0
        %v1357 = vmax.f32 %v1349, 0.0
        %v1358 = vmax.f32 %v1350, 0.0
        %v1359 = vmax.f32 %v1351, 0.0
        %v1360 = vmax.f32 %v1352, 0.0
        %v1361 = vmax.f32 %v1353, 0.0
        %1362 = vst [vmem:[#allocation2] sm:$0xff] 0.0
        %1363 = vst [vmem:[#allocation2 + $0x8] sm:$0xff] 0.0
        %1364 = vst [vmem:[#allocation2 + $0x10] sm:$0xff] 0.0
        %1365 = vst [vmem:[#allocation2 + $0x18] sm:$0xff] 0.0
        %1366 = vst [vmem:[#allocation2 + $0x20] sm:$0xff] 0.0
        %1367 = vst [vmem:[#allocation2 + $0x28] sm:$0xff] 0.0
        %1368 = vst [vmem:[#allocation2 + $0x30] sm:$0xff] 0.0
        %1369 = vst [vmem:[#allocation2 + $0x38] sm:$0xff] 0.0
        %1370 = vst [vmem:[#allocation2 + $0x40] sm:$0x3] 0.0
        %1371 = vst [vmem:[#allocation2 + $0x48] sm:$0x3] 0.0
        %vm1380 = vcmask 1040384
        %v1381 = vrot.slane %v1354, 7
        %v1382 = vrot.slane %v1355, 7
        %v1383 = vrot.slane %v1356, 7
        %v1384 = vsel %vm1380, %v1381, %v1383
        %v1385 = vrot.slane %v1357, 7
        %v1386 = vsel %vm1380, %v1382, %v1385
        %v1387 = vrot.slane %v1358, 7
        %v1388 = vsel %vm1380, %v1383, %v1387
        %v1389 = vrot.slane %v1359, 7
        %v1390 = vsel %vm1380, %v1385, %v1389
        %v1391 = vrot.slane %v1360, 7
        %v1392 = vsel %vm1380, %v1387, %v1391
        %v1393 = vrot.slane %v1361, 7
        %v1394 = vsel %vm1380, %v1389, %v1393
        %1405 = vst [vmem:[#allocation2] sm:$0xfe] %v1381
        %1406 = vst [vmem:[#allocation2 + $0x8] sm:$0xfe] %v1382
        %1407 = vst [vmem:[#allocation2 + $0x10] sm:$0xff] %v1384
        %1408 = vst [vmem:[#allocation2 + $0x18] sm:$0xff] %v1386
        %1409 = vst [vmem:[#allocation2 + $0x20] sm:$0xff] %v1388
        %1410 = vst [vmem:[#allocation2 + $0x28] sm:$0xff] %v1390
        %1411 = vst [vmem:[#allocation2 + $0x30] sm:$0xff] %v1392
        %1412 = vst [vmem:[#allocation2 + $0x38] sm:$0xff] %v1394
        %1413 = vst [vmem:[#allocation2 + $0x40] sm:$0x1] %v1391
        %1414 = vst [vmem:[#allocation2 + $0x48] sm:$0x1] %v1393
        %v1415 = vld [vmem:[#allocation2] sm:$0xff]
        %v1416 = vld [vmem:[#allocation2 + $0x8] sm:$0xff]
        %v1417 = vld [vmem:[#allocation2 + $0x10] sm:$0xff]
        %v1418 = vld [vmem:[#allocation2 + $0x18] sm:$0xff]
        %v1419 = vld [vmem:[#allocation2 + $0x20] sm:$0xff]
        %v1420 = vld [vmem:[#allocation2 + $0x28] sm:$0xff]
        %v1421 = vld [vmem:[#allocation2 + $0x30] sm:$0xff]
        %v1422 = vld [vmem:[#allocation2 + $0x38] sm:$0xff]
        %v1423 = vld [vmem:[#allocation6] sm:$0xff]
        %v1424 = vld [vmem:[#allocation6 + $0x8] sm:$0xff]
        %v1425 = vld [vmem:[#allocation6 + $0x10] sm:$0xff]
        %v1426 = vld [vmem:[#allocation6 + $0x18] sm:$0xff]
        %v1427 = vld [vmem:[#allocation6 + $0x20] sm:$0xff]
        %v1428 = vld [vmem:[#allocation6 + $0x28] sm:$0xff]
        %v1429 = vld [vmem:[#allocation6 + $0x30] sm:$0xff]
        %v1430 = vld [vmem:[#allocation6 + $0x38] sm:$0xff]
        %v1431 = vld [vmem:[#allocation6 + $0x40] sm:$0xff]
        %v1432 = vld [vmem:[#allocation6 + $0x48] sm:$0xff]
        %v1433 = vld [vmem:[#allocation6 + $0x50] sm:$0xff]
        %v1434 = vld [vmem:[#allocation6 + $0x58] sm:$0xff]
        %v1435 = vld [vmem:[#allocation6 + $0x60] sm:$0xff]
        %v1436 = vld [vmem:[#allocation6 + $0x68] sm:$0xff]
        %v1437 = vld [vmem:[#allocation6 + $0x70] sm:$0xff]
        %v1438 = vld [vmem:[#allocation6 + $0x78] sm:$0xff]
        %v1439 = vld [vmem:[#allocation6 + $0x80] sm:$0xff]
        %v1440 = vld [vmem:[#allocation6 + $0x88] sm:$0xff]
        %v1441 = vld [vmem:[#allocation6 + $0x90] sm:$0xff]
        %v1442 = vld [vmem:[#allocation6 + $0x98] sm:$0xff]
        %v1443 = vld [vmem:[#allocation6 + $0xa0] sm:$0xff]
        %v1444 = vld [vmem:[#allocation6 + $0xa8] sm:$0xff]
        %v1445 = vld [vmem:[#allocation6 + $0xb0] sm:$0xff]
        %v1446 = vld [vmem:[#allocation6 + $0xb8] sm:$0xff]
        %v1447 = vld [vmem:[#allocation6 + $0xc0] sm:$0xff]
        %v1448 = vld [vmem:[#allocation6 + $0xc8] sm:$0xff]
        %v1449 = vld [vmem:[#allocation6 + $0xd0] sm:$0xff]
        %v1450 = vld [vmem:[#allocation6 + $0xd8] sm:$0xff]
        %v1451 = vld [vmem:[#allocation6 + $0xe0] sm:$0xff]
        %v1452 = vld [vmem:[#allocation6 + $0xe8] sm:$0xff]
        %v1453 = vld [vmem:[#allocation6 + $0xf0] sm:$0xff]
        %v1454 = vld [vmem:[#allocation6 + $0xf8] sm:$0xff]
        %v1455 = vld [vmem:[#allocation6 + $0x100] sm:$0xff]
        %v1456 = vld [vmem:[#allocation6 + $0x108] sm:$0xff]
        %v1457 = vld [vmem:[#allocation6 + $0x110] sm:$0xff]
        %v1458 = vld [vmem:[#allocation6 + $0x118] sm:$0xff]
        %v1459 = vld [vmem:[#allocation6 + $0x120] sm:$0xff]
        %v1460 = vld [vmem:[#allocation6 + $0x128] sm:$0xff]
        %v1461 = vld [vmem:[#allocation6 + $0x130] sm:$0xff]
        %v1462 = vld [vmem:[#allocation6 + $0x138] sm:$0xff]
        %v1463 = vld [vmem:[#allocation6 + $0x140] sm:$0xff]
        %v1464 = vld [vmem:[#allocation6 + $0x148] sm:$0xff]
        %v1465 = vld [vmem:[#allocation6 + $0x150] sm:$0xff]
        %v1466 = vld [vmem:[#allocation6 + $0x158] sm:$0xff]
        %v1467 = vld [vmem:[#allocation6 + $0x160] sm:$0xff]
        %v1468 = vld [vmem:[#allocation6 + $0x168] sm:$0xff]
        %v1469 = vld [vmem:[#allocation6 + $0x170] sm:$0xff]
        %v1470 = vld [vmem:[#allocation6 + $0x178] sm:$0xff]
        %v1471 = vld [vmem:[#allocation6 + $0x180] sm:$0xff]
        %v1472 = vld [vmem:[#allocation6 + $0x188] sm:$0xff]
        %v1473 = vld [vmem:[#allocation6 + $0x190] sm:$0xff]
        %v1474 = vld [vmem:[#allocation6 + $0x198] sm:$0xff]
        %v1475 = vld [vmem:[#allocation6 + $0x1a0] sm:$0xff]
        %v1476 = vld [vmem:[#allocation6 + $0x1a8] sm:$0xff]
        %v1477 = vld [vmem:[#allocation6 + $0x1b0] sm:$0xff]
        %v1478 = vld [vmem:[#allocation6 + $0x1b8] sm:$0xff]
        %v1479 = vld [vmem:[#allocation6 + $0x1c0] sm:$0xff]
        %v1480 = vld [vmem:[#allocation6 + $0x1c8] sm:$0xff]
        %v1481 = vld [vmem:[#allocation6 + $0x1d0] sm:$0xff]
        %v1482 = vld [vmem:[#allocation6 + $0x1d8] sm:$0xff]
        %v1483 = vld [vmem:[#allocation6 + $0x1e0] sm:$0xff]
        %v1484 = vld [vmem:[#allocation6 + $0x1e8] sm:$0xff]
        %v1485 = vld [vmem:[#allocation6 + $0x1f0] sm:$0xff]
        %v1486 = vld [vmem:[#allocation6 + $0x1f8] sm:$0xff]
        %v1487 = vld [vmem:[#allocation2] sm:$0xfe]
        %v1488 = vld [vmem:[#allocation2 + $0x8] sm:$0xfe]
        %v1489 = vld [vmem:[#allocation2 + $0x40] sm:$0x1]
        %v1490 = vld [vmem:[#allocation2 + $0x48] sm:$0x1]
        %s1491 = scalar_lea.vmem [#allocation6], 512
        %v1492 = vld [vmem:[%s1491] sm:$0xff]
        %v1493 = vld [vmem:[%s1491 + $0x8] sm:$0xff]
        %v1494 = vld [vmem:[%s1491 + $0x10] sm:$0xff]
        %v1495 = vld [vmem:[%s1491 + $0x18] sm:$0xff]
        %v1496 = vld [vmem:[%s1491 + $0x20] sm:$0xff]
        %v1497 = vld [vmem:[%s1491 + $0x28] sm:$0xff]
        %v1498 = vld [vmem:[%s1491 + $0x30] sm:$0xff]
        %v1499 = vld [vmem:[%s1491 + $0x38] sm:$0xff]
        %v1500 = vld [vmem:[%s1491 + $0x40] sm:$0xff]
        %v1501 = vld [vmem:[%s1491 + $0x48] sm:$0xff]
        %v1502 = vld [vmem:[%s1491 + $0x50] sm:$0xff]
        %v1503 = vld [vmem:[%s1491 + $0x58] sm:$0xff]
        %v1504 = vld [vmem:[%s1491 + $0x60] sm:$0xff]
        %v1505 = vld [vmem:[%s1491 + $0x68] sm:$0xff]
        %v1506 = vld [vmem:[%s1491 + $0x70] sm:$0xff]
        %v1507 = vld [vmem:[%s1491 + $0x78] sm:$0xff]
        %v1508 = vld [vmem:[%s1491 + $0x80] sm:$0xff]
        %v1509 = vld [vmem:[%s1491 + $0x88] sm:$0xff]
        %v1510 = vld [vmem:[%s1491 + $0x90] sm:$0xff]
        %v1511 = vld [vmem:[%s1491 + $0x98] sm:$0xff]
        %v1512 = vld [vmem:[%s1491 + $0xa0] sm:$0xff]
        %v1513 = vld [vmem:[%s1491 + $0xa8] sm:$0xff]
        %v1514 = vld [vmem:[%s1491 + $0xb0] sm:$0xff]
        %v1515 = vld [vmem:[%s1491 + $0xb8] sm:$0xff]
        %v1516 = vld [vmem:[%s1491 + $0xc0] sm:$0xff]
        %v1517 = vld [vmem:[%s1491 + $0xc8] sm:$0xff]
        %v1518 = vld [vmem:[%s1491 + $0xd0] sm:$0xff]
        %v1519 = vld [vmem:[%s1491 + $0xd8] sm:$0xff]
        %v1520 = vld [vmem:[%s1491 + $0xe0] sm:$0xff]
        %v1521 = vld [vmem:[%s1491 + $0xe8] sm:$0xff]
        %v1522 = vld [vmem:[%s1491 + $0xf0] sm:$0xff]
        %v1523 = vld [vmem:[%s1491 + $0xf8] sm:$0xff]
        %v1524 = vld [vmem:[%s1491 + $0x100] sm:$0xff]
        %v1525 = vld [vmem:[%s1491 + $0x108] sm:$0xff]
        %v1526 = vld [vmem:[%s1491 + $0x110] sm:$0xff]
        %v1527 = vld [vmem:[%s1491 + $0x118] sm:$0xff]
        %v1528 = vld [vmem:[%s1491 + $0x120] sm:$0xff]
        %v1529 = vld [vmem:[%s1491 + $0x128] sm:$0xff]
        %v1530 = vld [vmem:[%s1491 + $0x130] sm:$0xff]
        %v1531 = vld [vmem:[%s1491 + $0x138] sm:$0xff]
        %v1532 = vld [vmem:[%s1491 + $0x140] sm:$0xff]
        %v1533 = vld [vmem:[%s1491 + $0x148] sm:$0xff]
        %v1534 = vld [vmem:[%s1491 + $0x150] sm:$0xff]
        %v1535 = vld [vmem:[%s1491 + $0x158] sm:$0xff]
        %v1536 = vld [vmem:[%s1491 + $0x160] sm:$0xff]
        %v1537 = vld [vmem:[%s1491 + $0x168] sm:$0xff]
        %v1538 = vld [vmem:[%s1491 + $0x170] sm:$0xff]
        %v1539 = vld [vmem:[%s1491 + $0x178] sm:$0xff]
        %v1540 = vld [vmem:[%s1491 + $0x180] sm:$0xff]
        %v1541 = vld [vmem:[%s1491 + $0x188] sm:$0xff]
        %v1542 = vld [vmem:[%s1491 + $0x190] sm:$0xff]
        %v1543 = vld [vmem:[%s1491 + $0x198] sm:$0xff]
        %v1544 = vld [vmem:[%s1491 + $0x1a0] sm:$0xff]
        %v1545 = vld [vmem:[%s1491 + $0x1a8] sm:$0xff]
        %v1546 = vld [vmem:[%s1491 + $0x1b0] sm:$0xff]
        %v1547 = vld [vmem:[%s1491 + $0x1b8] sm:$0xff]
        %v1548 = vld [vmem:[%s1491 + $0x1c0] sm:$0xff]
        %v1549 = vld [vmem:[%s1491 + $0x1c8] sm:$0xff]
        %v1550 = vld [vmem:[%s1491 + $0x1d0] sm:$0xff]
        %v1551 = vld [vmem:[%s1491 + $0x1d8] sm:$0xff]
        %v1552 = vld [vmem:[%s1491 + $0x1e0] sm:$0xff]
        %v1553 = vld [vmem:[%s1491 + $0x1e8] sm:$0xff]
        %v1554 = vld [vmem:[%s1491 + $0x1f0] sm:$0xff]
        %v1555 = vld [vmem:[%s1491 + $0x1f8] sm:$0xff]
        %v1566 = vrot.slane %v1487, 1
        %v1567 = vrot.slane %v1417, 1
        %v1568 = vsel %vm583, %v1566, %v1567
        %v1569 = vrot.slane %v1488, 1
        %v1570 = vrot.slane %v1418, 1
        %v1571 = vsel %vm583, %v1569, %v1570
        %v1572 = vrot.slane %v1419, 1
        %v1573 = vsel %vm583, %v1567, %v1572
        %v1574 = vrot.slane %v1420, 1
        %v1575 = vsel %vm583, %v1570, %v1574
        %v1576 = vrot.slane %v1421, 1
        %v1577 = vsel %vm583, %v1572, %v1576
        %v1578 = vrot.slane %v1422, 1
        %v1579 = vsel %vm583, %v1574, %v1578
        %v1580 = vrot.slane %v1489, 1
        %v1581 = vsel %vm583, %v1576, %v1580
        %v1582 = vrot.slane %v1490, 1
        %v1583 = vsel %vm583, %v1578, %v1582
        %1592 = vmatprep.subr.mxu0 %v1493
        %1593 = vmatpush1.msra.mxu0 %v1492
        %1594 = vmatprep.subr.mxu0 %v1495
        %1595 = vmatpush1.msra.mxu0 %v1494
        %1596 = vmatprep.subr.mxu0 %v1497
        %1597 = vmatpush1.msra.mxu0 %v1496
        %1598 = vmatprep.subr.mxu0 %v1499
        %1599 = vmatpush1.msra.mxu0 %v1498
        %1600 = vmatprep.subr.mxu0 %v1501
        %1601 = vmatpush1.msra.mxu0 %v1500
        %1602 = vmatprep.subr.mxu0 %v1503
        %1603 = vmatpush1.msra.mxu0 %v1502
        %1604 = vmatprep.subr.mxu0 %v1505
        %1605 = vmatpush1.msra.mxu0 %v1504
        %1606 = vmatprep.subr.mxu0 %v1507
        %1607 = vmatpush1.msra.mxu0 %v1506
        %1608 = vmatprep.subr.mxu0 %v1509
        %1609 = vmatpush1.msra.mxu0 %v1508
        %1610 = vmatprep.subr.mxu0 %v1511
        %1611 = vmatpush1.msra.mxu0 %v1510
        %1612 = vmatprep.subr.mxu0 %v1513
        %1613 = vmatpush1.msra.mxu0 %v1512
        %1614 = vmatprep.subr.mxu0 %v1515
        %1615 = vmatpush1.msra.mxu0 %v1514
        %1616 = vmatprep.subr.mxu0 %v1517
        %1617 = vmatpush1.msra.mxu0 %v1516
        %1618 = vmatprep.subr.mxu0 %v1519
        %1619 = vmatpush1.msra.mxu0 %v1518
        %1620 = vmatprep.subr.mxu0 %v1521
        %1621 = vmatpush1.msra.mxu0 %v1520
        %1622 = vmatprep.subr.mxu0 %v1523
        %1623 = vmatpush1.msra.mxu0 %v1522
        %1624 = vmatprep.subr.mxu0 %v1525
        %1625 = vmatpush1.msra.mxu0 %v1524
        %1626 = vmatprep.subr.mxu0 %v1527
        %1627 = vmatpush1.msra.mxu0 %v1526
        %1628 = vmatprep.subr.mxu0 %v1529
        %1629 = vmatpush1.msra.mxu0 %v1528
        %1630 = vmatprep.subr.mxu0 %v1531
        %1631 = vmatpush1.msra.mxu0 %v1530
        %1632 = vmatprep.subr.mxu0 %v1533
        %1633 = vmatpush1.msra.mxu0 %v1532
        %1634 = vmatprep.subr.mxu0 %v1535
        %1635 = vmatpush1.msra.mxu0 %v1534
        %1636 = vmatprep.subr.mxu0 %v1537
        %1637 = vmatpush1.msra.mxu0 %v1536
        %1638 = vmatprep.subr.mxu0 %v1539
        %1639 = vmatpush1.msra.mxu0 %v1538
        %1640 = vmatprep.subr.mxu0 %v1541
        %1641 = vmatpush1.msra.mxu0 %v1540
        %1642 = vmatprep.subr.mxu0 %v1543
        %1643 = vmatpush1.msra.mxu0 %v1542
        %1644 = vmatprep.subr.mxu0 %v1545
        %1645 = vmatpush1.msra.mxu0 %v1544
        %1646 = vmatprep.subr.mxu0 %v1547
        %1647 = vmatpush1.msra.mxu0 %v1546
        %1648 = vmatprep.subr.mxu0 %v1549
        %1649 = vmatpush1.msra.mxu0 %v1548
        %1650 = vmatprep.subr.mxu0 %v1551
        %1651 = vmatpush1.msra.mxu0 %v1550
        %1652 = vmatprep.subr.mxu0 %v1553
        %1653 = vmatpush1.msra.mxu0 %v1552
        %1654 = vmatprep.subr.mxu0 %v1555
        %1655 = vmatpush1.msra.mxu0 %v1554
        %1656 = vmatprep.mubr.f32.mxu0 %v1571
        %1657 = vmatmul.mubr.f32.gmra.mrb[0].mxu0 %v1568
        %v1658 = vpop.f32.mrb[0].mxu0
        %v1659 = vadd.f32 0.0, %v1658
        %v1660 = vpop.f32.mrb[0].mxu0
        %v1661 = vadd.f32 0.0, %v1660
        %1662 = vmatprep.mubr.f32.mxu0 %v1575
        %1663 = vmatmul.mubr.f32.gmra.mrb[0].mxu0 %v1573
        %v1664 = vpop.f32.mrb[0].mxu0
        %v1665 = vadd.f32 0.0, %v1664
        %v1666 = vpop.f32.mrb[0].mxu0
        %v1667 = vadd.f32 0.0, %v1666
        %1668 = vmatprep.mubr.f32.mxu0 %v1579
        %1669 = vmatmul.mubr.f32.gmra.mrb[0].mxu0 %v1577
        %v1670 = vpop.f32.mrb[0].mxu0
        %v1671 = vadd.f32 0.0, %v1670
        %v1672 = vpop.f32.mrb[0].mxu0
        %v1673 = vadd.f32 0.0, %v1672
        %1674 = vmatprep.mubr.f32.mxu0 %v1583
        %1675 = vmatmul.mubr.f32.gmra.mrb[0].mxu0 %v1581
        %v1676 = vpop.f32.mrb[0].mxu0
        %v1677 = vadd.f32 0.0, %v1676
        %v1678 = vpop.f32.mrb[0].mxu0
        %v1679 = vadd.f32 0.0, %v1678
        %1680 = vdwg.mxu0
        %1681 = vmatprep.subr.mxu0 %v1424
        %1682 = vmatpush1.msra.mxu0 %v1423
        %1683 = vmatprep.subr.mxu0 %v1426
        %1684 = vmatpush1.msra.mxu0 %v1425
        %1685 = vmatprep.subr.mxu0 %v1428
        %1686 = vmatpush1.msra.mxu0 %v1427
        %1687 = vmatprep.subr.mxu0 %v1430
        %1688 = vmatpush1.msra.mxu0 %v1429
        %1689 = vmatprep.subr.mxu0 %v1432
        %1690 = vmatpush1.msra.mxu0 %v1431
        %1691 = vmatprep.subr.mxu0 %v1434
        %1692 = vmatpush1.msra.mxu0 %v1433
        %1693 = vmatprep.subr.mxu0 %v1436
        %1694 = vmatpush1.msra.mxu0 %v1435
        %1695 = vmatprep.subr.mxu0 %v1438
        %1696 = vmatpush1.msra.mxu0 %v1437
        %1697 = vmatprep.subr.mxu0 %v1440
        %1698 = vmatpush1.msra.mxu0 %v1439
        %1699 = vmatprep.subr.mxu0 %v1442
        %1700 = vmatpush1.msra.mxu0 %v1441
        %1701 = vmatprep.subr.mxu0 %v1444
        %1702 = vmatpush1.msra.mxu0 %v1443
        %1703 = vmatprep.subr.mxu0 %v1446
        %1704 = vmatpush1.msra.mxu0 %v1445
        %1705 = vmatprep.subr.mxu0 %v1448
        %1706 = vmatpush1.msra.mxu0 %v1447
        %1707 = vmatprep.subr.mxu0 %v1450
        %1708 = vmatpush1.msra.mxu0 %v1449
        %1709 = vmatprep.subr.mxu0 %v1452
        %1710 = vmatpush1.msra.mxu0 %v1451
        %1711 = vmatprep.subr.mxu0 %v1454
        %1712 = vmatpush1.msra.mxu0 %v1453
        %1713 = vmatprep.subr.mxu0 %v1456
        %1714 = vmatpush1.msra.mxu0 %v1455
        %1715 = vmatprep.subr.mxu0 %v1458
        %1716 = vmatpush1.msra.mxu0 %v1457
        %1717 = vmatprep.subr.mxu0 %v1460
        %1718 = vmatpush1.msra.mxu0 %v1459
        %1719 = vmatprep.subr.mxu0 %v1462
        %1720 = vmatpush1.msra.mxu0 %v1461
        %1721 = vmatprep.subr.mxu0 %v1464
        %1722 = vmatpush1.msra.mxu0 %v1463
        %1723 = vmatprep.subr.mxu0 %v1466
        %1724 = vmatpush1.msra.mxu0 %v1465
        %1725 = vmatprep.subr.mxu0 %v1468
        %1726 = vmatpush1.msra.mxu0 %v1467
        %1727 = vmatprep.subr.mxu0 %v1470
        %1728 = vmatpush1.msra.mxu0 %v1469
        %1729 = vmatprep.subr.mxu0 %v1472
        %1730 = vmatpush1.msra.mxu0 %v1471
        %1731 = vmatprep.subr.mxu0 %v1474
        %1732 = vmatpush1.msra.mxu0 %v1473
        %1733 = vmatprep.subr.mxu0 %v1476
        %1734 = vmatpush1.msra.mxu0 %v1475
        %1735 = vmatprep.subr.mxu0 %v1478
        %1736 = vmatpush1.msra.mxu0 %v1477
        %1737 = vmatprep.subr.mxu0 %v1480
        %1738 = vmatpush1.msra.mxu0 %v1479
        %1739 = vmatprep.subr.mxu0 %v1482
        %1740 = vmatpush1.msra.mxu0 %v1481
        %1741 = vmatprep.subr.mxu0 %v1484
        %1742 = vmatpush1.msra.mxu0 %v1483
        %1743 = vmatprep.subr.mxu0 %v1486
        %1744 = vmatpush1.msra.mxu0 %v1485
        %1745 = vmatprep.mubr.f32.mxu0 %v1416
        %1746 = vmatmul.mubr.f32.gmra.mrb[0].mxu0 %v1415
        %v1747 = vpop.f32.mrb[0].mxu0
        %v1748 = vadd.f32 %v1659, %v1747
        %v1749 = vpop.f32.mrb[0].mxu0
        %v1750 = vadd.f32 %v1661, %v1749
        %1751 = vmatprep.mubr.f32.mxu0 %v1418
        %1752 = vmatmul.mubr.f32.gmra.mrb[0].mxu0 %v1417
        %v1753 = vpop.f32.mrb[0].mxu0
        %v1754 = vadd.f32 %v1665, %v1753
        %v1755 = vpop.f32.mrb[0].mxu0
        %v1756 = vadd.f32 %v1667, %v1755
        %1757 = vmatprep.mubr.f32.mxu0 %v1420
        %1758 = vmatmul.mubr.f32.gmra.mrb[0].mxu0 %v1419
        %v1759 = vpop.f32.mrb[0].mxu0
        %v1760 = vadd.f32 %v1671, %v1759
        %v1761 = vpop.f32.mrb[0].mxu0
        %v1762 = vadd.f32 %v1673, %v1761
        %1763 = vmatprep.mubr.f32.mxu0 %v1422
        %1764 = vmatmul.mubr.f32.gmra.mrb[0].mxu0 %v1421
        %v1765 = vpop.f32.mrb[0].mxu0
        %v1766 = vadd.f32 %v1677, %v1765
        %v1767 = vpop.f32.mrb[0].mxu0
        %v1768 = vadd.f32 %v1679, %v1767
        %1769 = vdwg.mxu0
        %v1770 = vld [vmem:[#allocation2] sm:$0xfc]
        %v1771 = vld [vmem:[#allocation2 + $0x8] sm:$0xfc]
        %v1772 = vld [vmem:[#allocation2 + $0x40] sm:$0x3]
        %v1773 = vld [vmem:[#allocation2 + $0x48] sm:$0x3]
        %s1774 = scalar_lea.vmem [#allocation6], 1024
        %v1775 = vld [vmem:[%s1774] sm:$0xff]
        %v1776 = vld [vmem:[%s1774 + $0x8] sm:$0xff]
        %v1777 = vld [vmem:[%s1774 + $0x10] sm:$0xff]
        %v1778 = vld [vmem:[%s1774 + $0x18] sm:$0xff]
        %v1779 = vld [vmem:[%s1774 + $0x20] sm:$0xff]
        %v1780 = vld [vmem:[%s1774 + $0x28] sm:$0xff]
        %v1781 = vld [vmem:[%s1774 + $0x30] sm:$0xff]
        %v1782 = vld [vmem:[%s1774 + $0x38] sm:$0xff]
        %v1783 = vld [vmem:[%s1774 + $0x40] sm:$0xff]
        %v1784 = vld [vmem:[%s1774 + $0x48] sm:$0xff]
        %v1785 = vld [vmem:[%s1774 + $0x50] sm:$0xff]
        %v1786 = vld [vmem:[%s1774 + $0x58] sm:$0xff]
        %v1787 = vld [vmem:[%s1774 + $0x60] sm:$0xff]
        %v1788 = vld [vmem:[%s1774 + $0x68] sm:$0xff]
        %v1789 = vld [vmem:[%s1774 + $0x70] sm:$0xff]
        %v1790 = vld [vmem:[%s1774 + $0x78] sm:$0xff]
        %v1791 = vld [vmem:[%s1774 + $0x80] sm:$0xff]
        %v1792 = vld [vmem:[%s1774 + $0x88] sm:$0xff]
        %v1793 = vld [vmem:[%s1774 + $0x90] sm:$0xff]
        %v1794 = vld [vmem:[%s1774 + $0x98] sm:$0xff]
        %v1795 = vld [vmem:[%s1774 + $0xa0] sm:$0xff]
        %v1796 = vld [vmem:[%s1774 + $0xa8] sm:$0xff]
        %v1797 = vld [vmem:[%s1774 + $0xb0] sm:$0xff]
        %v1798 = vld [vmem:[%s1774 + $0xb8] sm:$0xff]
        %v1799 = vld [vmem:[%s1774 + $0xc0] sm:$0xff]
        %v1800 = vld [vmem:[%s1774 + $0xc8] sm:$0xff]
        %v1801 = vld [vmem:[%s1774 + $0xd0] sm:$0xff]
        %v1802 = vld [vmem:[%s1774 + $0xd8] sm:$0xff]
        %v1803 = vld [vmem:[%s1774 + $0xe0] sm:$0xff]
        %v1804 = vld [vmem:[%s1774 + $0xe8] sm:$0xff]
        %v1805 = vld [vmem:[%s1774 + $0xf0] sm:$0xff]
        %v1806 = vld [vmem:[%s1774 + $0xf8] sm:$0xff]
        %v1807 = vld [vmem:[%s1774 + $0x100] sm:$0xff]
        %v1808 = vld [vmem:[%s1774 + $0x108] sm:$0xff]
        %v1809 = vld [vmem:[%s1774 + $0x110] sm:$0xff]
        %v1810 = vld [vmem:[%s1774 + $0x118] sm:$0xff]
        %v1811 = vld [vmem:[%s1774 + $0x120] sm:$0xff]
        %v1812 = vld [vmem:[%s1774 + $0x128] sm:$0xff]
        %v1813 = vld [vmem:[%s1774 + $0x130] sm:$0xff]
        %v1814 = vld [vmem:[%s1774 + $0x138] sm:$0xff]
        %v1815 = vld [vmem:[%s1774 + $0x140] sm:$0xff]
        %v1816 = vld [vmem:[%s1774 + $0x148] sm:$0xff]
        %v1817 = vld [vmem:[%s1774 + $0x150] sm:$0xff]
        %v1818 = vld [vmem:[%s1774 + $0x158] sm:$0xff]
        %v1819 = vld [vmem:[%s1774 + $0x160] sm:$0xff]
        %v1820 = vld [vmem:[%s1774 + $0x168] sm:$0xff]
        %v1821 = vld [vmem:[%s1774 + $0x170] sm:$0xff]
        %v1822 = vld [vmem:[%s1774 + $0x178] sm:$0xff]
        %v1823 = vld [vmem:[%s1774 + $0x180] sm:$0xff]
        %v1824 = vld [vmem:[%s1774 + $0x188] sm:$0xff]
        %v1825 = vld [vmem:[%s1774 + $0x190] sm:$0xff]
        %v1826 = vld [vmem:[%s1774 + $0x198] sm:$0xff]
        %v1827 = vld [vmem:[%s1774 + $0x1a0] sm:$0xff]
        %v1828 = vld [vmem:[%s1774 + $0x1a8] sm:$0xff]
        %v1829 = vld [vmem:[%s1774 + $0x1b0] sm:$0xff]
        %v1830 = vld [vmem:[%s1774 + $0x1b8] sm:$0xff]
        %v1831 = vld [vmem:[%s1774 + $0x1c0] sm:$0xff]
        %v1832 = vld [vmem:[%s1774 + $0x1c8] sm:$0xff]
        %v1833 = vld [vmem:[%s1774 + $0x1d0] sm:$0xff]
        %v1834 = vld [vmem:[%s1774 + $0x1d8] sm:$0xff]
        %v1835 = vld [vmem:[%s1774 + $0x1e0] sm:$0xff]
        %v1836 = vld [vmem:[%s1774 + $0x1e8] sm:$0xff]
        %v1837 = vld [vmem:[%s1774 + $0x1f0] sm:$0xff]
        %v1838 = vld [vmem:[%s1774 + $0x1f8] sm:$0xff]
        %v1843 = vrot.slane %v1770, 2
        %v1844 = vrot.slane %v1417, 2
        %v1845 = vsel %vm1088, %v1843, %v1844
        %v1846 = vrot.slane %v1771, 2
        %v1847 = vrot.slane %v1418, 2
        %v1848 = vsel %vm1088, %v1846, %v1847
        %v1849 = vrot.slane %v1419, 2
        %v1850 = vsel %vm1088, %v1844, %v1849
        %v1851 = vrot.slane %v1420, 2
        %v1852 = vsel %vm1088, %v1847, %v1851
        %v1853 = vrot.slane %v1421, 2
        %v1854 = vsel %vm1088, %v1849, %v1853
        %v1855 = vrot.slane %v1422, 2
        %v1856 = vsel %vm1088, %v1851, %v1855
        %v1857 = vrot.slane %v1772, 2
        %v1858 = vsel %vm1088, %v1853, %v1857
        %v1859 = vrot.slane %v1773, 2
        %v1860 = vsel %vm1088, %v1855, %v1859
        %1869 = vmatprep.subr.mxu0 %v1776
        %1870 = vmatpush1.msra.mxu0 %v1775
        %1871 = vmatprep.subr.mxu0 %v1778
        %1872 = vmatpush1.msra.mxu0 %v1777
        %1873 = vmatprep.subr.mxu0 %v1780
        %1874 = vmatpush1.msra.mxu0 %v1779
        %1875 = vmatprep.subr.mxu0 %v1782
        %1876 = vmatpush1.msra.mxu0 %v1781
        %1877 = vmatprep.subr.mxu0 %v1784
        %1878 = vmatpush1.msra.mxu0 %v1783
        %1879 = vmatprep.subr.mxu0 %v1786
        %1880 = vmatpush1.msra.mxu0 %v1785
        %1881 = vmatprep.subr.mxu0 %v1788
        %1882 = vmatpush1.msra.mxu0 %v1787
        %1883 = vmatprep.subr.mxu0 %v1790
        %1884 = vmatpush1.msra.mxu0 %v1789
        %1885 = vmatprep.subr.mxu0 %v1792
        %1886 = vmatpush1.msra.mxu0 %v1791
        %1887 = vmatprep.subr.mxu0 %v1794
        %1888 = vmatpush1.msra.mxu0 %v1793
        %1889 = vmatprep.subr.mxu0 %v1796
        %1890 = vmatpush1.msra.mxu0 %v1795
        %1891 = vmatprep.subr.mxu0 %v1798
        %1892 = vmatpush1.msra.mxu0 %v1797
        %1893 = vmatprep.subr.mxu0 %v1800
        %1894 = vmatpush1.msra.mxu0 %v1799
        %1895 = vmatprep.subr.mxu0 %v1802
        %1896 = vmatpush1.msra.mxu0 %v1801
        %1897 = vmatprep.subr.mxu0 %v1804
        %1898 = vmatpush1.msra.mxu0 %v1803
        %1899 = vmatprep.subr.mxu0 %v1806
        %1900 = vmatpush1.msra.mxu0 %v1805
        %1901 = vmatprep.subr.mxu0 %v1808
        %1902 = vmatpush1.msra.mxu0 %v1807
        %1903 = vmatprep.subr.mxu0 %v1810
        %1904 = vmatpush1.msra.mxu0 %v1809
        %1905 = vmatprep.subr.mxu0 %v1812
        %1906 = vmatpush1.msra.mxu0 %v1811
        %1907 = vmatprep.subr.mxu0 %v1814
        %1908 = vmatpush1.msra.mxu0 %v1813
        %1909 = vmatprep.subr.mxu0 %v1816
        %1910 = vmatpush1.msra.mxu0 %v1815
        %1911 = vmatprep.subr.mxu0 %v1818
        %1912 = vmatpush1.msra.mxu0 %v1817
        %1913 = vmatprep.subr.mxu0 %v1820
        %1914 = vmatpush1.msra.mxu0 %v1819
        %1915 = vmatprep.subr.mxu0 %v1822
        %1916 = vmatpush1.msra.mxu0 %v1821
        %1917 = vmatprep.subr.mxu0 %v1824
        %1918 = vmatpush1.msra.mxu0 %v1823
        %1919 = vmatprep.subr.mxu0 %v1826
        %1920 = vmatpush1.msra.mxu0 %v1825
        %1921 = vmatprep.subr.mxu0 %v1828
        %1922 = vmatpush1.msra.mxu0 %v1827
        %1923 = vmatprep.subr.mxu0 %v1830
        %1924 = vmatpush1.msra.mxu0 %v1829
        %1925 = vmatprep.subr.mxu0 %v1832
        %1926 = vmatpush1.msra.mxu0 %v1831
        %1927 = vmatprep.subr.mxu0 %v1834
        %1928 = vmatpush1.msra.mxu0 %v1833
        %1929 = vmatprep.subr.mxu0 %v1836
        %1930 = vmatpush1.msra.mxu0 %v1835
        %1931 = vmatprep.subr.mxu0 %v1838
        %1932 = vmatpush1.msra.mxu0 %v1837
        %1933 = vmatprep.mubr.f32.mxu0 %v1848
        %1934 = vmatmul.mubr.f32.gmra.mrb[0].mxu0 %v1845
        %v1935 = vpop.f32.mrb[0].mxu0
        %v1936 = vadd.f32 0.0, %v1935
        %v1937 = vpop.f32.mrb[0].mxu0
        %v1938 = vadd.f32 0.0, %v1937
        %1939 = vmatprep.mubr.f32.mxu0 %v1852
        %1940 = vmatmul.mubr.f32.gmra.mrb[0].mxu0 %v1850
        %v1941 = vpop.f32.mrb[0].mxu0
        %v1942 = vadd.f32 0.0, %v1941
        %v1943 = vpop.f32.mrb[0].mxu0
        %v1944 = vadd.f32 0.0, %v1943
        %1945 = vmatprep.mubr.f32.mxu0 %v1856
        %1946 = vmatmul.mubr.f32.gmra.mrb[0].mxu0 %v1854
        %v1947 = vpop.f32.mrb[0].mxu0
        %v1948 = vadd.f32 0.0, %v1947
        %v1949 = vpop.f32.mrb[0].mxu0
        %v1950 = vadd.f32 0.0, %v1949
        %1951 = vmatprep.mubr.f32.mxu0 %v1860
        %1952 = vmatmul.mubr.f32.gmra.mrb[0].mxu0 %v1858
        %v1953 = vpop.f32.mrb[0].mxu0
        %v1954 = vadd.f32 0.0, %v1953
        %v1955 = vpop.f32.mrb[0].mxu0
        %v1956 = vadd.f32 0.0, %v1955
        %1957 = vdwg.mxu0
        %v1958 = vadd.f32 %v1748, %v1936
        %v1959 = vadd.f32 %v1750, %v1938
        %v1960 = vadd.f32 %v1754, %v1942
        %v1961 = vadd.f32 %v1756, %v1944
        %v1962 = vadd.f32 %v1760, %v1948
        %v1963 = vadd.f32 %v1762, %v1950
        %v1964 = vadd.f32 %v1766, %v1954
        %v1965 = vadd.f32 %v1768, %v1956
        %v1966 = vld [vmem:[#allocation11] sm:$0x3]
        %v1968 = vlaneseq
        %v1969 = vshrl.u32 %v1968, 7
        %v1970 = vsub.s32 0, %v1969
        %v1971 = vrot.slane %v1966, %v1970
        %v1972 = vlaneseq
        %v1973 = vshrl.u32 %v1972, 7
        %v1974 = vsub.s32 1, %v1973
        %v1975 = vrot.slane %v1966, %v1974
        %v1978 = vmul.f32 %v1958, %v1971
        %v1979 = vmul.f32 %v1959, %v1975
        %v1980 = vmul.f32 %v1960, %v1971
        %v1981 = vmul.f32 %v1961, %v1975
        %v1982 = vmul.f32 %v1962, %v1971
        %v1983 = vmul.f32 %v1963, %v1975
        %v1984 = vmul.f32 %v1964, %v1971
        %v1985 = vmul.f32 %v1965, %v1975
        %v1986 = vld [vmem:[#allocation12] sm:$0x3]
        %v1988 = vlaneseq
        %v1989 = vshrl.u32 %v1988, 7
        %v1990 = vsub.s32 0, %v1989
        %v1991 = vrot.slane %v1986, %v1990
        %v1992 = vlaneseq
        %v1993 = vshrl.u32 %v1992, 7
        %v1994 = vsub.s32 1, %v1993
        %v1995 = vrot.slane %v1986, %v1994
        %v1998 = vadd.f32 %v1978, %v1991
        %v1999 = vadd.f32 %v1979, %v1995
        %v2000 = vadd.f32 %v1980, %v1991
        %v2001 = vadd.f32 %v1981, %v1995
        %v2002 = vadd.f32 %v1982, %v1991
        %v2003 = vadd.f32 %v1983, %v1995
        %v2004 = vadd.f32 %v1984, %v1991
        %v2005 = vadd.f32 %v1985, %v1995
        %v2006 = vmax.f32 %v1998, 0.0
        %v2007 = vmax.f32 %v1999, 0.0
        %v2008 = vmax.f32 %v2000, 0.0
        %v2009 = vmax.f32 %v2001, 0.0
        %v2010 = vmax.f32 %v2002, 0.0
        %v2011 = vmax.f32 %v2003, 0.0
        %v2012 = vmax.f32 %v2004, 0.0
        %v2013 = vmax.f32 %v2005, 0.0
        %2014 = vst [vmem:[%s351] sm:$0xff] %v2006
        %2015 = vst [vmem:[%s351 + $0x8] sm:$0xff] %v2007
        %2016 = vst [vmem:[%s351 + $0x10] sm:$0xff] %v2008
        %2017 = vst [vmem:[%s351 + $0x18] sm:$0xff] %v2009
        %2018 = vst [vmem:[%s351 + $0x20] sm:$0xff] %v2010
        %2019 = vst [vmem:[%s351 + $0x28] sm:$0xff] %v2011
        %2020 = vst [vmem:[%s351 + $0x30] sm:$0xff] %v2012
        %2021 = vst [vmem:[%s351 + $0x38] sm:$0xff] %v2013
        %s2022 = sand.u32 %s185, 1
        %s2023 = scalar_lea.sflag [#allocation5], %s2022
        %s2024 = sand.u32 %s185, 1
        %s2025 = smul.addr %s2024, 64
        %s2026 = scalar_lea.vmem [#allocation14], %s2025
        // Predicated region
        $region73: #{tpu_custom_call.1} parent=47 // pred_check
          %p2027 = pneg %p195
        $region74: #{tpu_custom_call.1} parent=47 // pred_check_branch
          %2029 = sbr.rel (%p2027) target = $region76
        $region75: #{tpu_custom_call.1} parent=47 // pred_region
          %s2031 = ssub.s32 1024, 1024
          %2032 = vsyncadd %s2023, %s2031
          %s2033 = smul.addr %s25, 8
          %s2034 = smul.addr %s2033, 128
          %s2035 = scalar_lea.hbm %s7, %s2034
          %s2036 = sshll.u32 %s2026, 4
          %s2037 = int_to_ptr.vmem [resolvable:$true] %s2036
          %2042 = dma.vmem_to_hbm [thread:$0]  %s2037, 1024, %s2035, %s2023, 256, 256, 16
        $region76: #{tpu_custom_call.1} parent=47 // pred_fallthru
          _
      $region48: #{tpu_custom_call.1} parent=5 // pred_fallthru
        _
      %p2043 = scmp.le.s32.totalorder 2, %s20
      // Predicated region
      $region77: #{tpu_custom_call.1} parent=5 // pred_check
        %p2044 = pneg %p2043
      $region78: #{tpu_custom_call.1} parent=5 // pred_check_branch
        %2046 = sbr.rel (%p2044) target = $region80
      $region79: #{tpu_custom_call.1} parent=5 // pred_region
        %s2047 = ssub.s32 %s20, 2
        // Predicated region
        $region81: #{tpu_custom_call.1} parent=79 // pred_check
          %p2048 = pneg %p201
        $region82: #{tpu_custom_call.1} parent=79 // pred_check_branch
          %2050 = sbr.rel (%p2048) target = $region84
        $region83: #{tpu_custom_call.1} parent=79 // pred_region
          %s2051 = sand.u32 %s186, 1
          %s2052 = scalar_lea.sflag [#allocation5], %s2051
          %s2053 = sand.u32 %s186, 1
          %s2054 = smul.addr %s2053, 64
          %s2055 = scalar_lea.vmem [#allocation14], %s2054
          %2056 = dma.done %s2052, 1024
        $region84: #{tpu_custom_call.1} parent=79 // pred_fallthru
          _
      $region80: #{tpu_custom_call.1} parent=5 // pred_fallthru
        _
    $region6: #{tpu_custom_call.1} parent=1 // loop_footer
      %s24 = sadd.s32 1, %s20
    $region7: #{tpu_custom_call.1} parent=1 // loop_footer_branch
      %19 = sbr.rel target = $region3
    $region8: #{tpu_custom_call.1} parent=1 // loop_exit
      _
    %2057 = vsyncpa [#allocation4], 1
    %s2058 = scalar_lea.sflag [#allocation4], 1
    %2059 = vsyncpa %s2058, 1
    %2060 = vsyncpa [#allocation7], 1
    %2061 = vsyncpa [#allocation10], 1
    %2062 = vsyncpa [#allocation13], 1
    %2063 = vsyncpa [#allocation5], 1
    %s2064 = scalar_lea.sflag [#allocation5], 1
    %2065 = vsyncpa %s2064, 1

</llo_original>
